<compile_context>
chip_gen: v7x
topology: tpu7x:2x2x1
jax: 0.10.0
libtpu: 0.0.40
codegen_flags: <defaults>
</compile_context>

<pallas_src>
import jax
import jax.numpy as jnp
from jax.experimental import pallas as pl
from jax.experimental.pallas import tpu as pltpu

_LANES = 128
_FEATS = 128


def _make_kernel(S, TB, tiles_per_part, b_true, b_pad):
    need_mask = (b_pad != b_true)

    def kernel(x_ref, w_ref, b_ref, y_ref, out_ref):
        # x_ref:   (S, 128, 128)  rows of x (128 features on the lane axis)
        # w_ref:   (1, 128)       (w1 - w0) / r
        # b_ref:   (1, 1) SMEM    (b1 - b0) / r
        # y_ref:   (S, 128)       labels, lane-dense
        # out_ref: (S, 128)       per-part partial-loss accumulator (resident across i)
        i = pl.program_id(1)

        @pl.when(i == 0)
        def _init():
            out_ref[...] = jnp.zeros_like(out_ref)

        x = x_ref[...].astype(jnp.float32)                        # (S, 128, 128)
        # Logit difference t = (x @ (w1 - w0) + (b1 - b0)) / r  (1/r already folded in).
        # VPU multiply + lane reduce; result is lane-dense (S, 128).
        t = jnp.sum(x * w_ref[...], axis=-1) + b_ref[0, 0]        # (S, 128)

        # BCE on p1 = sigmoid(t), in log space, sharing one exp and one log:
        #   log p1    = min(t, 0)  - log(1 + exp(-|t|))
        #   log(1-p1) = min(-t, 0) - log(1 + exp(-|t|))
        # with PyTorch BCELoss's clamp of the log terms at -100.
        log1p_e = jnp.log(1.0 + jnp.exp(-jnp.abs(t)))
        log_p = jnp.maximum(jnp.minimum(t, 0.0) - log1p_e, -100.0)
        log_1mp = jnp.maximum(jnp.minimum(-t, 0.0) - log1p_e, -100.0)
        y = y_ref[...]
        per_ex = -(y * log_p + (1.0 - y) * log_1mp)               # (S, 128)

        if need_mask:
            c = pl.program_id(0)
            tile_start = (c * tiles_per_part + i) * TB
            row = (jax.lax.broadcasted_iota(jnp.int32, (S, _LANES), 0) * _LANES
                   + jax.lax.broadcasted_iota(jnp.int32, (S, _LANES), 1))
            per_ex = jnp.where(tile_start + row < b_true, per_ex, 0.0)

        out_ref[...] += per_ex

    return kernel


def lossv_forward(x, labels, w, b, r=1.0, block_rows=2048):
    """Forward of lossV.  x: (B, 1, 128); labels: (B,); w: (2, 128); b: (2,). Returns f32 loss."""
    B = x.shape[0]
    x2 = jnp.reshape(x, (B, _FEATS))                  # squeeze(1)
    if x2.dtype != jnp.bfloat16:                      # keep bf16 in HBM; everything else -> f32
        x2 = x2.astype(jnp.float32)

    w = w.astype(jnp.float32)
    b = b.astype(jnp.float32)
    inv_r = 1.0 / jnp.asarray(r, jnp.float32)
    wdiff = ((w[1] - w[0]) * inv_r).reshape(1, _FEATS)            # (1, 128)
    bdiff = ((b[1] - b[0]) * inv_r).reshape(1, 1)                 # (1, 1) SMEM scalar
    y = labels.astype(jnp.float32).reshape(B)

    # ---- batch tiling -------------------------------------------------------
    rows = -(-B // _LANES) * _LANES                   # round up to lane width
    TB = min(block_rows, rows)                        # rows per grid step (multiple of 128)
    S = TB // _LANES
    n_tiles = -(-rows // TB)
    num_parts = 2 if n_tiles >= 2 else 1              # v7x: split batch across 2 TensorCores
    tiles_per_part = -(-n_tiles // num_parts)
    B_pad = num_parts * tiles_per_part * TB

    if B_pad != B:
        x2 = jnp.pad(x2, ((0, B_pad - B), (0, 0)))
        y = jnp.pad(y, (0, B_pad - B))
    x3 = x2.reshape(B_pad // _LANES, _LANES, _FEATS)  # free reshape
    y2 = y.reshape(B_pad // _LANES, _LANES)           # lane-dense labels, free reshape

    kernel = _make_kernel(S, TB, tiles_per_part, B, B_pad)

    partial = pl.pallas_call(
        kernel,
        out_shape=jax.ShapeDtypeStruct((num_parts * S, _LANES), jnp.float32),
        grid_spec=pltpu.PrefetchScalarGridSpec(
            num_scalar_prefetch=0,
            grid=(num_parts, tiles_per_part),
            in_specs=[
                # x: (S, 128, 128) blocks, double-buffered by the Pallas pipeline.
                # (For v7x one could additionally use pipeline_mode=pl.Buffered(3).)
                pl.BlockSpec((S, _LANES, _FEATS),
                             lambda c, i: (c * tiles_per_part + i, 0, 0)),
                pl.BlockSpec((1, _FEATS), lambda c, i: (0, 0)),
                pl.BlockSpec(memory_space=pltpu.SMEM),
                pl.BlockSpec((S, _LANES), lambda c, i: (c * tiles_per_part + i, 0)),
            ],
            out_specs=pl.BlockSpec((S, _LANES), lambda c, i: (c, 0)),
        ),
        compiler_params=pltpu.CompilerParams(
            dimension_semantics=("parallel", "arbitrary")),
    )(x3, wdiff, bdiff, y2)

    # Mean over the true (global) batch size; partial sums from both parts combined here.
    return jnp.sum(partial) * (1.0 / B)


def _reference(x, labels, w, b, r=1.0):
    x2 = jnp.squeeze(x, axis=1).astype(jnp.float32)
    z = (x2 @ w.T + b) / r
    p = jax.nn.softmax(z, axis=-1)[:, 1]
    y = labels.astype(jnp.float32)
    log_p = jnp.maximum(jnp.log(p), -100.0)
    log_1mp = jnp.maximum(jnp.log(1.0 - p), -100.0)
    return jnp.mean(-(y * log_p + (1.0 - y) * log_1mp))


if __name__ == "__main__":
    key = jax.random.PRNGKey(0)
    k_x, k_w, k_b, k_y = jax.random.split(key, 4)

    B, F_IN, F_OUT = 8, 128, 2
    x = jax.random.normal(k_x, (B, 1, F_IN), dtype=jnp.float32)
    labels = jax.random.bernoulli(k_y, 0.5, (B,)).astype(jnp.float32)

    # nn.Linear(128, 2) default init: U(-1/sqrt(128), 1/sqrt(128))
    bound = 1.0 / jnp.sqrt(jnp.float32(F_IN))
    w = jax.random.uniform(k_w, (F_OUT, F_IN), jnp.float32, -bound, bound)
    b = jax.random.uniform(k_b, (F_OUT,), jnp.float32, -bound, bound)

    loss = lossv_forward(x, labels, w, b, r=1.0)
    loss = jax.block_until_ready(loss)

    ref = _reference(x, labels, w, b, r=1.0)
    assert jnp.allclose(loss, ref, atol=1e-5, rtol=1e-5), (loss, ref)

    print("KERNEL_OK")
</pallas_src>

<mosaic_0001>
module attributes {stable_mosaic.version = 11 : i64} {
  func.func @kernel(%arg0: i32, %arg1: i32, %arg2: memref<1x128x128xf32, #tpu.memory_space<vmem>>, %arg3: memref<1x128xf32, #tpu.memory_space<vmem>>, %arg4: memref<1x1xf32, #tpu.memory_space<smem>>, %arg5: memref<1x128xf32, #tpu.memory_space<vmem>>, %arg6: memref<1x128xf32, #tpu.memory_space<vmem>>) attributes {dimension_semantics = [#tpu.dimension_semantics<parallel>, #tpu.dimension_semantics<arbitrary>], iteration_bounds = array<i64: 1, 1>, scalar_prefetch = 0 : i64, scratch_operands = 0 : i64, tpu.core_type = #tpu.core_type<tc>, window_params = [{transform_indices = @transform_0, window_bounds = array<i64: 1, 128, 128>}, {pipeline_mode = #tpu.pipeline_mode<synchronous>, transform_indices = @transform_1, window_bounds = array<i64: 1, 128>}, {transform_indices = @transform_2, window_bounds = array<i64: 1, 1>}, {transform_indices = @transform_3, window_bounds = array<i64: 1, 128>}, {transform_indices = @transform_4, window_bounds = array<i64: 1, 128>}]} {
    %c0_i32 = arith.constant 0 : i32
    %0 = arith.cmpi eq, %arg1, %c0_i32 : i32
    %1 = arith.extui %0 : i1 to i32
    %c0_i32_0 = arith.constant 0 : i32
    %2 = arith.cmpi ne, %1, %c0_i32_0 : i32
    scf.if %2 {
      %cst_24 = arith.constant 0.000000e+00 : f32
      %56 = vector.broadcast %cst_24 : f32 to vector<1x128xf32>
      %c0_25 = arith.constant 0 : index
      %c0_26 = arith.constant 0 : index
      %57 = vector.load %arg6[%c0_25, %c0_26] : memref<1x128xf32, #tpu.memory_space<vmem>>, vector<1x128xf32>
      tpu.vector_store %arg6[%c0_25, %c0_26], %56 {strides = array<i32>} : memref<1x128xf32, #tpu.memory_space<vmem>>, vector<1x128xf32>,
    } else {
    }
    %c0 = arith.constant 0 : index
    %c0_1 = arith.constant 0 : index
    %c0_2 = arith.constant 0 : index
    %3 = vector.load %arg2[%c0, %c0_1, %c0_2] : memref<1x128x128xf32, #tpu.memory_space<vmem>>, vector<1x128x128xf32>
    %c0_3 = arith.constant 0 : index
    %c0_4 = arith.constant 0 : index
    %4 = vector.load %arg3[%c0_3, %c0_4] : memref<1x128xf32, #tpu.memory_space<vmem>>, vector<1x128xf32>
    %5 = vector.shape_cast %4 : vector<1x128xf32> to vector<1x1x128xf32>
    %6 = vector.broadcast %5 : vector<1x1x128xf32> to vector<1x128x128xf32>
    %7 = arith.mulf %3, %6 : vector<1x128x128xf32>
    %cst = arith.constant dense<0.000000e+00> : vector<1x128xf32>
    %8 = vector.multi_reduction <add>, %7, %cst [2] : vector<1x128x128xf32> to vector<1x128xf32>
    %c0_5 = arith.constant 0 : index
    %c0_6 = arith.constant 0 : index
    %9 = memref.load %arg4[%c0_5, %c0_6] : memref<1x1xf32, #tpu.memory_space<smem>>
    %10 = vector.broadcast %9 : f32 to vector<1x128xf32>
    %11 = arith.addf %8, %10 : vector<1x128xf32>
    %12 = math.absf %11 : vector<1x128xf32>
    %cst_7 = arith.constant 0.000000e+00 : f32
    %13 = vector.broadcast %cst_7 : f32 to vector<1x128xf32>
    %14 = arith.subf %13, %12 : vector<1x128xf32>
    %15 = math.exp %14 : vector<1x128xf32>
    %cst_8 = arith.constant 1.000000e+00 : f32
    %16 = vector.broadcast %cst_8 : f32 to vector<1x128xf32>
    %17 = arith.addf %16, %15 : vector<1x128xf32>
    %18 = math.log %17 : vector<1x128xf32>
    %cst_9 = arith.constant 0.000000e+00 : f32
    %19 = vector.broadcast %cst_9 : f32 to vector<1x128xf32>
    %20 = arith.minimumf %11, %19 : vector<1x128xf32>
    %21 = arith.subf %20, %18 : vector<1x128xf32>
    %cst_10 = arith.constant -1.000000e+02 : f32
    %22 = vector.broadcast %cst_10 : f32 to vector<1x128xf32>
    %23 = arith.maximumf %21, %22 : vector<1x128xf32>
    %cst_11 = arith.constant 0.000000e+00 : f32
    %24 = vector.broadcast %cst_11 : f32 to vector<1x128xf32>
    %25 = arith.subf %24, %11 : vector<1x128xf32>
    %cst_12 = arith.constant 0.000000e+00 : f32
    %26 = vector.broadcast %cst_12 : f32 to vector<1x128xf32>
    %27 = arith.minimumf %25, %26 : vector<1x128xf32>
    %28 = arith.subf %27, %18 : vector<1x128xf32>
    %cst_13 = arith.constant -1.000000e+02 : f32
    %29 = vector.broadcast %cst_13 : f32 to vector<1x128xf32>
    %30 = arith.maximumf %28, %29 : vector<1x128xf32>
    %c0_14 = arith.constant 0 : index
    %c0_15 = arith.constant 0 : index
    %31 = vector.load %arg5[%c0_14, %c0_15] : memref<1x128xf32, #tpu.memory_space<vmem>>, vector<1x128xf32>
    %32 = arith.mulf %31, %23 : vector<1x128xf32>
    %cst_16 = arith.constant 1.000000e+00 : f32
    %33 = vector.broadcast %cst_16 : f32 to vector<1x128xf32>
    %34 = arith.subf %33, %31 : vector<1x128xf32>
    %35 = arith.mulf %34, %30 : vector<1x128xf32>
    %36 = arith.addf %32, %35 : vector<1x128xf32>
    %cst_17 = arith.constant 0.000000e+00 : f32
    %37 = vector.broadcast %cst_17 : f32 to vector<1x128xf32>
    %38 = arith.subf %37, %36 : vector<1x128xf32>
    %c1_i32 = arith.constant 1 : i32
    %39 = arith.muli %arg0, %c1_i32 : i32
    %40 = arith.addi %39, %arg1 : i32
    %c128_i32 = arith.constant 128 : i32
    %41 = arith.muli %40, %c128_i32 : i32
    %42 = tpu.iota {dimensions = array<i32: 0>} : vector<1x128xi32>
    %c128_i32_18 = arith.constant 128 : i32
    %43 = vector.broadcast %c128_i32_18 : i32 to vector<1x128xi32>
    %44 = arith.muli %42, %43 : vector<1x128xi32>
    %45 = tpu.iota {dimensions = array<i32: 1>} : vector<1x128xi32>
    %46 = arith.addi %44, %45 : vector<1x128xi32>
    %47 = vector.broadcast %41 : i32 to vector<1x128xi32>
    %48 = arith.addi %47, %46 : vector<1x128xi32>
    %c8_i32 = arith.constant 8 : i32
    %49 = vector.broadcast %c8_i32 : i32 to vector<1x128xi32>
    %50 = arith.cmpi slt, %48, %49 : vector<1x128xi32>
    %cst_19 = arith.constant 0.000000e+00 : f32
    %51 = vector.broadcast %cst_19 : f32 to vector<1x128xf32>
    %52 = arith.select %50, %38, %51 : vector<1x128xi1>, vector<1x128xf32>
    %c0_20 = arith.constant 0 : index
    %c0_21 = arith.constant 0 : index
    %53 = vector.load %arg6[%c0_20, %c0_21] : memref<1x128xf32, #tpu.memory_space<vmem>>, vector<1x128xf32>
    %54 = arith.addf %53, %52 : vector<1x128xf32>
    %c0_22 = arith.constant 0 : index
    %c0_23 = arith.constant 0 : index
    %55 = vector.load %arg6[%c0_22, %c0_23] : memref<1x128xf32, #tpu.memory_space<vmem>>, vector<1x128xf32>
    tpu.vector_store %arg6[%c0_22, %c0_23], %54 {strides = array<i32>} : memref<1x128xf32, #tpu.memory_space<vmem>>, vector<1x128xf32>,
    return
  }
  func.func @transform_0(%arg0: i32, %arg1: i32) -> (i32, i32, i32) {
    %c1_i32 = arith.constant 1 : i32
    %0 = arith.muli %arg0, %c1_i32 : i32
    %1 = arith.addi %0, %arg1 : i32
    %c0_i32 = arith.constant 0 : i32
    %c0_i32_0 = arith.constant 0 : i32
    %c0_i32_1 = arith.constant 0 : i32
    return %1, %c0_i32, %c0_i32_0 : i32, i32, i32
  }
  func.func @transform_1(%arg0: i32, %arg1: i32) -> (i32, i32) {
    %c0_i32 = arith.constant 0 : i32
    %c0_i32_0 = arith.constant 0 : i32
    %c0_i32_1 = arith.constant 0 : i32
    return %c0_i32, %c0_i32_0 : i32, i32
  }
  func.func @transform_2(%arg0: i32, %arg1: i32) -> (i32, i32) {
    %c0_i32 = arith.constant 0 : i32
    %c0_i32_0 = arith.constant 0 : i32
    %c0_i32_1 = arith.constant 0 : i32
    return %c0_i32, %c0_i32_0 : i32, i32
  }
  func.func @transform_3(%arg0: i32, %arg1: i32) -> (i32, i32) {
    %c1_i32 = arith.constant 1 : i32
    %0 = arith.muli %arg0, %c1_i32 : i32
    %1 = arith.addi %0, %arg1 : i32
    %c0_i32 = arith.constant 0 : i32
    %c0_i32_0 = arith.constant 0 : i32
    return %1, %c0_i32 : i32, i32
  }
  func.func @transform_4(%arg0: i32, %arg1: i32) -> (i32, i32) {
    %c0_i32 = arith.constant 0 : i32
    %c0_i32_0 = arith.constant 0 : i32
    return %arg0, %c0_i32 : i32, i32
  }
}

</mosaic_0001>

<llo_original>
// kernel: tpu_custom_call.1
$region0: #{tpu_custom_call.1}
  #allocation0 [shape = 'u32[]', space=smem, size = 0x4, offset = 0x4, fixed_abs, tag = 'smem constant byte address 0x4 - core index']
  #allocation1 [shape = 'u32[144,128]{1,0:T(1,128)}', space=vmem, size = 0x12000, scoped, tag = 'internal scratch']
  #allocation2 [shape = 'f32[1,1]{1,0:T(1,128)S(6)}', space=smem, size = 0x200, scoped, tag = 'scoped memory for tpu_custom_call.1']
  %s0 = inlined_call_operand.hbm [shape: f32[1,128,128], index: 0, kind: input, shape index: {}]
  %s1 = inlined_call_operand.vmem [shape: f32[1,128], index: 1, kind: input, shape index: {}]
  %s2 = inlined_call_operand.<no memory space> [shape: f32[1,1], index: 2, kind: input, shape index: {}]
  %s3 = inlined_call_operand.vmem [shape: f32[1,128], index: 3, kind: input, shape index: {}]
  %s4 = inlined_call_operand.hbm [shape: f32[1,128], index: 4, kind: output, shape index: {}]
  %s5 = sld [smem:[#allocation0]]
  $region34: #{tpu_custom_call.1} parent=0
    _
  %s7 = ssub.s32 1, %s5
  %s8 = scalar_select 0, %s7, %s5
  %9 = sst [smem:[#allocation2]] %s2
  $region1: #{tpu_custom_call.1} parent=0
    #allocation3 [shape = 'u8[65536]{0}', space=vmem, size = 0x10000, scoped, tag = 'input window, operand 0, single buffered']
    #allocation4 [shape = 's32[1]{0}', space=sflag, size = 0x4, scoped, tag = 'scoped memory for tpu_custom_call.1']
    #allocation5 [shape = 's32[1]{0}', space=sflag, size = 0x4, scoped, tag = 'scoped memory for tpu_custom_call.1']
    #allocation6 [shape = 'u8[512]{0}', space=vmem, size = 0x400, scoped, tag = 'output window, operand 0, single buffered']
    %10 = vsyncpa [#allocation4], 0
    %11 = vsyncpa [#allocation5], 0
    // Predicated region
    $region2: #{tpu_custom_call.1} parent=1 // pred_check
      _
    $region3: #{tpu_custom_call.1} parent=1 // pred_check_branch
      %13 = sbr.rel (0) target = $region5
    $region4: #{tpu_custom_call.1} parent=1 // pred_region
      %s14 = sadd.s32 0, 0
      %s16 = ssub.s32 2048, 2048
      %17 = vsyncadd [#allocation4], %s16
      %s18 = smul.addr %s14, 16
      %s19 = smul.addr %s18, 128
      %s20 = scalar_lea.hbm %s0, %s19
      %s21 = sshll.u32 [#allocation3], 4
      %s22 = int_to_ptr.vmem [resolvable:$true] %s21
      %27 = dma.hbm_to_vmem [thread:$0]  %s20, 2048, %s22, [#allocation4], 128, 128, 8
    $region5: #{tpu_custom_call.1} parent=1 // pred_fallthru
      _
    // Predicated region
    $region6: #{tpu_custom_call.1} parent=1 // pred_check
      _
    $region7: #{tpu_custom_call.1} parent=1 // pred_check_branch
      %29 = sbr.rel (0) target = $region9
    $region8: #{tpu_custom_call.1} parent=1 // pred_region
      _
    $region9: #{tpu_custom_call.1} parent=1 // pred_fallthru
      _
    // Predicated region
    $region10: #{tpu_custom_call.1} parent=1 // pred_check
      _
    $region11: #{tpu_custom_call.1} parent=1 // pred_check_branch
      %31 = sbr.rel (0) target = $region13
    $region12: #{tpu_custom_call.1} parent=1 // pred_region
      _
    $region13: #{tpu_custom_call.1} parent=1 // pred_fallthru
      _
    // Predicated region
    $region14: #{tpu_custom_call.1} parent=1 // pred_check
      _
    $region15: #{tpu_custom_call.1} parent=1 // pred_check_branch
      %33 = sbr.rel (0) target = $region17
    $region16: #{tpu_custom_call.1} parent=1 // pred_region
      %s34 = sadd.s32 0, 0
      %p35 = scmp.lt.s32.totalorder %s34, 0
      %s36 = scalar_select %p35, %s34, 0
      %s37 = scalar_lea.vmem %s3, %s36
      %s38 = sadd.s32 0, 0
    $region17: #{tpu_custom_call.1} parent=1 // pred_fallthru
      _
    // Predicated region
    $region18: #{tpu_custom_call.1} parent=1 // pred_check
      _
    $region19: #{tpu_custom_call.1} parent=1 // pred_check_branch
      %40 = sbr.rel (0) target = $region21
    $region20: #{tpu_custom_call.1} parent=1 // pred_region
      %41 = dma.done [#allocation4], 2048
    $region21: #{tpu_custom_call.1} parent=1 // pred_fallthru
      _
    %s42 = sadd.s32 0, 0
    %p43 = scmp.lt.s32.totalorder %s42, 0
    %s44 = scalar_select %p43, %s42, 0
    %s45 = scalar_lea.vmem %s3, %s44
    %s46 = sadd.s32 0, 0
    %s47 = sadd.s32 0, 0
    %p48 = scmp.lt.s32.totalorder %s47, 0
    %s49 = scalar_select %p48, %s47, 0
    %s50 = scalar_lea.vmem %s3, %s49
    %s51 = sadd.s32 0, 0
    %p52 = scmp.eq.s32.totalorder 0, 0
    // Predicated region
    $region22: #{tpu_custom_call.1} parent=1 // pred_check
      %p53 = pneg %p52
    $region23: #{tpu_custom_call.1} parent=1 // pred_check_branch
      %55 = sbr.rel (%p53) target = $region25
    $region24: #{tpu_custom_call.1} parent=1 // pred_region
      %56 = vst [vmem:[#allocation6] sm:$0x1] 0.0
    $region25: #{tpu_custom_call.1} parent=1 // pred_fallthru
      _
    %v57 = vld [vmem:[#allocation3] sm:$0xff]
    %v58 = vld [vmem:[#allocation3 + $0x8] sm:$0xff]
    %v59 = vld [vmem:[#allocation3 + $0x10] sm:$0xff]
    %v60 = vld [vmem:[#allocation3 + $0x18] sm:$0xff]
    %v61 = vld [vmem:[#allocation3 + $0x20] sm:$0xff]
    %v62 = vld [vmem:[#allocation3 + $0x28] sm:$0xff]
    %v63 = vld [vmem:[#allocation3 + $0x30] sm:$0xff]
    %v64 = vld [vmem:[#allocation3 + $0x38] sm:$0xff]
    %v65 = vld [vmem:[#allocation3 + $0x40] sm:$0xff]
    %v66 = vld [vmem:[#allocation3 + $0x48] sm:$0xff]
    %v67 = vld [vmem:[#allocation3 + $0x50] sm:$0xff]
    %v68 = vld [vmem:[#allocation3 + $0x58] sm:$0xff]
    %v69 = vld [vmem:[#allocation3 + $0x60] sm:$0xff]
    %v70 = vld [vmem:[#allocation3 + $0x68] sm:$0xff]
    %v71 = vld [vmem:[#allocation3 + $0x70] sm:$0xff]
    %v72 = vld [vmem:[#allocation3 + $0x78] sm:$0xff]
    %v73 = vld [vmem:[%s1] sm:$0x1]
    %v75 = vlaneseq
    %v76 = vshrl.u32 %v75, 7
    %v77 = vsub.s32 0, %v76
    %v78 = vrot.slane %v73, %v77
    %v80 = vmul.f32 %v57, %v78
    %v81 = vmul.f32 %v58, %v78
    %v82 = vmul.f32 %v59, %v78
    %v83 = vmul.f32 %v60, %v78
    %v84 = vmul.f32 %v61, %v78
    %v85 = vmul.f32 %v62, %v78
    %v86 = vmul.f32 %v63, %v78
    %v87 = vmul.f32 %v64, %v78
    %v88 = vmul.f32 %v65, %v78
    %v89 = vmul.f32 %v66, %v78
    %v90 = vmul.f32 %v67, %v78
    %v91 = vmul.f32 %v68, %v78
    %v92 = vmul.f32 %v69, %v78
    %v93 = vmul.f32 %v70, %v78
    %v94 = vmul.f32 %v71, %v78
    %v95 = vmul.f32 %v72, %v78
    %96 = vadd.xlane.f32.xlu0 %v80
    %v97 = vpop.xlane.xlu0 %96
    %98 = vadd.xlane.f32.xlu0 %v81
    %v99 = vpop.xlane.xlu0 %98
    %100 = vadd.xlane.f32.xlu0 %v82
    %v101 = vpop.xlane.xlu0 %100
    %102 = vadd.xlane.f32.xlu0 %v83
    %v103 = vpop.xlane.xlu0 %102
    %104 = vadd.xlane.f32.xlu0 %v84
    %v105 = vpop.xlane.xlu0 %104
    %106 = vadd.xlane.f32.xlu0 %v85
    %v107 = vpop.xlane.xlu0 %106
    %108 = vadd.xlane.f32.xlu0 %v86
    %v109 = vpop.xlane.xlu0 %108
    %110 = vadd.xlane.f32.xlu0 %v87
    %v111 = vpop.xlane.xlu0 %110
    %112 = vadd.xlane.f32.xlu0 %v88
    %v113 = vpop.xlane.xlu0 %112
    %114 = vadd.xlane.f32.xlu0 %v89
    %v115 = vpop.xlane.xlu0 %114
    %116 = vadd.xlane.f32.xlu0 %v90
    %v117 = vpop.xlane.xlu0 %116
    %118 = vadd.xlane.f32.xlu0 %v91
    %v119 = vpop.xlane.xlu0 %118
    %120 = vadd.xlane.f32.xlu0 %v92
    %v121 = vpop.xlane.xlu0 %120
    %122 = vadd.xlane.f32.xlu0 %v93
    %v123 = vpop.xlane.xlu0 %122
    %124 = vadd.xlane.f32.xlu0 %v94
    %v125 = vpop.xlane.xlu0 %124
    %126 = vadd.xlane.f32.xlu0 %v95
    %v127 = vpop.xlane.xlu0 %126
    %s128 = sld [smem:[#allocation2]]
    %v129 = vstv %s128
    %v130 = vadd.f32 %v97, %v129
    %v131 = vadd.f32 %v99, %v129
    %v132 = vadd.f32 %v101, %v129
    %v133 = vadd.f32 %v103, %v129
    %v134 = vadd.f32 %v105, %v129
    %v135 = vadd.f32 %v107, %v129
    %v136 = vadd.f32 %v109, %v129
    %v137 = vadd.f32 %v111, %v129
    %v138 = vadd.f32 %v113, %v129
    %v139 = vadd.f32 %v115, %v129
    %v140 = vadd.f32 %v117, %v129
    %v141 = vadd.f32 %v119, %v129
    %v142 = vadd.f32 %v121, %v129
    %v143 = vadd.f32 %v123, %v129
    %v144 = vadd.f32 %v125, %v129
    %v145 = vadd.f32 %v127, %v129
    %v146 = vand.u32 2147483647, %v130
    %v147 = vand.u32 2147483647, %v131
    %v148 = vand.u32 2147483647, %v132
    %v149 = vand.u32 2147483647, %v133
    %v150 = vand.u32 2147483647, %v134
    %v151 = vand.u32 2147483647, %v135
    %v152 = vand.u32 2147483647, %v136
    %v153 = vand.u32 2147483647, %v137
    %v154 = vand.u32 2147483647, %v138
    %v155 = vand.u32 2147483647, %v139
    %v156 = vand.u32 2147483647, %v140
    %v157 = vand.u32 2147483647, %v141
    %v158 = vand.u32 2147483647, %v142
    %v159 = vand.u32 2147483647, %v143
    %v160 = vand.u32 2147483647, %v144
    %v161 = vand.u32 2147483647, %v145
    %v162 = vsub.f32 0.0, %v146
    %v163 = vsub.f32 0.0, %v147
    %v164 = vsub.f32 0.0, %v148
    %v165 = vsub.f32 0.0, %v149
    %v166 = vsub.f32 0.0, %v150
    %v167 = vsub.f32 0.0, %v151
    %v168 = vsub.f32 0.0, %v152
    %v169 = vsub.f32 0.0, %v153
    %v170 = vsub.f32 0.0, %v154
    %v171 = vsub.f32 0.0, %v155
    %v172 = vsub.f32 0.0, %v156
    %v173 = vsub.f32 0.0, %v157
    %v174 = vsub.f32 0.0, %v158
    %v175 = vsub.f32 0.0, %v159
    %v176 = vsub.f32 0.0, %v160
    %v177 = vsub.f32 0.0, %v161
    %v178 = vmul.f32 %v162, 1.442695
    %v179 = vpow.pop %v178
    %v180 = vmul.f32 %v163, 1.442695
    %v181 = vpow.pop %v180
    %v182 = vmul.f32 %v164, 1.442695
    %v183 = vpow.pop %v182
    %v184 = vmul.f32 %v165, 1.442695
    %v185 = vpow.pop %v184
    %v186 = vmul.f32 %v166, 1.442695
    %v187 = vpow.pop %v186
    %v188 = vmul.f32 %v167, 1.442695
    %v189 = vpow.pop %v188
    %v190 = vmul.f32 %v168, 1.442695
    %v191 = vpow.pop %v190
    %v192 = vmul.f32 %v169, 1.442695
    %v193 = vpow.pop %v192
    %v194 = vmul.f32 %v170, 1.442695
    %v195 = vpow.pop %v194
    %v196 = vmul.f32 %v171, 1.442695
    %v197 = vpow.pop %v196
    %v198 = vmul.f32 %v172, 1.442695
    %v199 = vpow.pop %v198
    %v200 = vmul.f32 %v173, 1.442695
    %v201 = vpow.pop %v200
    %v202 = vmul.f32 %v174, 1.442695
    %v203 = vpow.pop %v202
    %v204 = vmul.f32 %v175, 1.442695
    %v205 = vpow.pop %v204
    %v206 = vmul.f32 %v176, 1.442695
    %v207 = vpow.pop %v206
    %v208 = vmul.f32 %v177, 1.442695
    %v209 = vpow.pop %v208
    %v210 = vadd.f32 %v179, 1.0
    %v211 = vadd.f32 %v181, 1.0
    %v212 = vadd.f32 %v183, 1.0
    %v213 = vadd.f32 %v185, 1.0
    %v214 = vadd.f32 %v187, 1.0
    %v215 = vadd.f32 %v189, 1.0
    %v216 = vadd.f32 %v191, 1.0
    %v217 = vadd.f32 %v193, 1.0
    %v218 = vadd.f32 %v195, 1.0
    %v219 = vadd.f32 %v197, 1.0
    %v220 = vadd.f32 %v199, 1.0
    %v221 = vadd.f32 %v201, 1.0
    %v222 = vadd.f32 %v203, 1.0
    %v223 = vadd.f32 %v205, 1.0
    %v224 = vadd.f32 %v207, 1.0
    %v225 = vadd.f32 %v209, 1.0
    %v226 = vlog2.pop %v210
    %v227 = vmul.f32 %v226, 0.6931472
    %v228 = vlog2.pop %v211
    %v229 = vmul.f32 %v228, 0.6931472
    %v230 = vlog2.pop %v212
    %v231 = vmul.f32 %v230, 0.6931472
    %v232 = vlog2.pop %v213
    %v233 = vmul.f32 %v232, 0.6931472
    %v234 = vlog2.pop %v214
    %v235 = vmul.f32 %v234, 0.6931472
    %v236 = vlog2.pop %v215
    %v237 = vmul.f32 %v236, 0.6931472
    %v238 = vlog2.pop %v216
    %v239 = vmul.f32 %v238, 0.6931472
    %v240 = vlog2.pop %v217
    %v241 = vmul.f32 %v240, 0.6931472
    %v242 = vlog2.pop %v218
    %v243 = vmul.f32 %v242, 0.6931472
    %v244 = vlog2.pop %v219
    %v245 = vmul.f32 %v244, 0.6931472
    %v246 = vlog2.pop %v220
    %v247 = vmul.f32 %v246, 0.6931472
    %v248 = vlog2.pop %v221
    %v249 = vmul.f32 %v248, 0.6931472
    %v250 = vlog2.pop %v222
    %v251 = vmul.f32 %v250, 0.6931472
    %v252 = vlog2.pop %v223
    %v253 = vmul.f32 %v252, 0.6931472
    %v254 = vlog2.pop %v224
    %v255 = vmul.f32 %v254, 0.6931472
    %v256 = vlog2.pop %v225
    %v257 = vmul.f32 %v256, 0.6931472
    %v258 = vmin.f32 %v130, 0.0
    %v259 = vmin.f32 %v131, 0.0
    %v260 = vmin.f32 %v132, 0.0
    %v261 = vmin.f32 %v133, 0.0
    %v262 = vmin.f32 %v134, 0.0
    %v263 = vmin.f32 %v135, 0.0
    %v264 = vmin.f32 %v136, 0.0
    %v265 = vmin.f32 %v137, 0.0
    %v266 = vmin.f32 %v138, 0.0
    %v267 = vmin.f32 %v139, 0.0
    %v268 = vmin.f32 %v140, 0.0
    %v269 = vmin.f32 %v141, 0.0
    %v270 = vmin.f32 %v142, 0.0
    %v271 = vmin.f32 %v143, 0.0
    %v272 = vmin.f32 %v144, 0.0
    %v273 = vmin.f32 %v145, 0.0
    %v274 = vsub.f32 %v258, %v227
    %v275 = vsub.f32 %v259, %v229
    %v276 = vsub.f32 %v260, %v231
    %v277 = vsub.f32 %v261, %v233
    %v278 = vsub.f32 %v262, %v235
    %v279 = vsub.f32 %v263, %v237
    %v280 = vsub.f32 %v264, %v239
    %v281 = vsub.f32 %v265, %v241
    %v282 = vsub.f32 %v266, %v243
    %v283 = vsub.f32 %v267, %v245
    %v284 = vsub.f32 %v268, %v247
    %v285 = vsub.f32 %v269, %v249
    %v286 = vsub.f32 %v270, %v251
    %v287 = vsub.f32 %v271, %v253
    %v288 = vsub.f32 %v272, %v255
    %v289 = vsub.f32 %v273, %v257
    %v290 = vmax.f32 %v274, -100.0
    %v291 = vmax.f32 %v275, -100.0
    %v292 = vmax.f32 %v276, -100.0
    %v293 = vmax.f32 %v277, -100.0
    %v294 = vmax.f32 %v278, -100.0
    %v295 = vmax.f32 %v279, -100.0
    %v296 = vmax.f32 %v280, -100.0
    %v297 = vmax.f32 %v281, -100.0
    %v298 = vmax.f32 %v282, -100.0
    %v299 = vmax.f32 %v283, -100.0
    %v300 = vmax.f32 %v284, -100.0
    %v301 = vmax.f32 %v285, -100.0
    %v302 = vmax.f32 %v286, -100.0
    %v303 = vmax.f32 %v287, -100.0
    %v304 = vmax.f32 %v288, -100.0
    %v305 = vmax.f32 %v289, -100.0
    %v306 = vsub.f32 0.0, %v130
    %v307 = vsub.f32 0.0, %v131
    %v308 = vsub.f32 0.0, %v132
    %v309 = vsub.f32 0.0, %v133
    %v310 = vsub.f32 0.0, %v134
    %v311 = vsub.f32 0.0, %v135
    %v312 = vsub.f32 0.0, %v136
    %v313 = vsub.f32 0.0, %v137
    %v314 = vsub.f32 0.0, %v138
    %v315 = vsub.f32 0.0, %v139
    %v316 = vsub.f32 0.0, %v140
    %v317 = vsub.f32 0.0, %v141
    %v318 = vsub.f32 0.0, %v142
    %v319 = vsub.f32 0.0, %v143
    %v320 = vsub.f32 0.0, %v144
    %v321 = vsub.f32 0.0, %v145
    %v322 = vmin.f32 %v306, 0.0
    %v323 = vmin.f32 %v307, 0.0
    %v324 = vmin.f32 %v308, 0.0
    %v325 = vmin.f32 %v309, 0.0
    %v326 = vmin.f32 %v310, 0.0
    %v327 = vmin.f32 %v311, 0.0
    %v328 = vmin.f32 %v312, 0.0
    %v329 = vmin.f32 %v313, 0.0
    %v330 = vmin.f32 %v314, 0.0
    %v331 = vmin.f32 %v315, 0.0
    %v332 = vmin.f32 %v316, 0.0
    %v333 = vmin.f32 %v317, 0.0
    %v334 = vmin.f32 %v318, 0.0
    %v335 = vmin.f32 %v319, 0.0
    %v336 = vmin.f32 %v320, 0.0
    %v337 = vmin.f32 %v321, 0.0
    %v338 = vsub.f32 %v322, %v227
    %v339 = vsub.f32 %v323, %v229
    %v340 = vsub.f32 %v324, %v231
    %v341 = vsub.f32 %v325, %v233
    %v342 = vsub.f32 %v326, %v235
    %v343 = vsub.f32 %v327, %v237
    %v344 = vsub.f32 %v328, %v239
    %v345 = vsub.f32 %v329, %v241
    %v346 = vsub.f32 %v330, %v243
    %v347 = vsub.f32 %v331, %v245
    %v348 = vsub.f32 %v332, %v247
    %v349 = vsub.f32 %v333, %v249
    %v350 = vsub.f32 %v334, %v251
    %v351 = vsub.f32 %v335, %v253
    %v352 = vsub.f32 %v336, %v255
    %v353 = vsub.f32 %v337, %v257
    %v354 = vmax.f32 %v338, -100.0
    %v355 = vmax.f32 %v339, -100.0
    %v356 = vmax.f32 %v340, -100.0
    %v357 = vmax.f32 %v341, -100.0
    %v358 = vmax.f32 %v342, -100.0
    %v359 = vmax.f32 %v343, -100.0
    %v360 = vmax.f32 %v344, -100.0
    %v361 = vmax.f32 %v345, -100.0
    %v362 = vmax.f32 %v346, -100.0
    %v363 = vmax.f32 %v347, -100.0
    %v364 = vmax.f32 %v348, -100.0
    %v365 = vmax.f32 %v349, -100.0
    %v366 = vmax.f32 %v350, -100.0
    %v367 = vmax.f32 %v351, -100.0
    %v368 = vmax.f32 %v352, -100.0
    %v369 = vmax.f32 %v353, -100.0
    %v370 = vld [vmem:[%s50] sm:$0x1]
    %v387 = vlaneseq
    %v388 = vshrl.u32 %v387, 7
    %v389 = vsub.s32 0, %v388
    %v390 = vrot.slane %v290, %v389
    %v391 = vlaneseq
    %v392 = vshrl.u32 %v391, 7
    %v393 = vsub.s32 1, %v392
    %v394 = vrot.slane %v290, %v393
    %v395 = vlaneseq
    %v396 = vshrl.u32 %v395, 7
    %v397 = vsub.s32 2, %v396
    %v398 = vrot.slane %v290, %v397
    %v399 = vlaneseq
    %v400 = vshrl.u32 %v399, 7
    %v401 = vsub.s32 3, %v400
    %v402 = vrot.slane %v290, %v401
    %v403 = vlaneseq
    %v404 = vshrl.u32 %v403, 7
    %v405 = vsub.s32 4, %v404
    %v406 = vrot.slane %v290, %v405
    %v407 = vlaneseq
    %v408 = vshrl.u32 %v407, 7
    %v409 = vsub.s32 5, %v408
    %v410 = vrot.slane %v290, %v409
    %v411 = vlaneseq
    %v412 = vshrl.u32 %v411, 7
    %v413 = vsub.s32 6, %v412
    %v414 = vrot.slane %v290, %v413
    %v415 = vlaneseq
    %v416 = vshrl.u32 %v415, 7
    %v417 = vsub.s32 7, %v416
    %v418 = vrot.slane %v290, %v417
    %v419 = vlaneseq
    %v420 = vshrl.u32 %v419, 7
    %v421 = vsub.s32 0, %v420
    %v422 = vrot.slane %v291, %v421
    %v423 = vlaneseq
    %v424 = vshrl.u32 %v423, 7
    %v425 = vsub.s32 1, %v424
    %v426 = vrot.slane %v291, %v425
    %v427 = vlaneseq
    %v428 = vshrl.u32 %v427, 7
    %v429 = vsub.s32 2, %v428
    %v430 = vrot.slane %v291, %v429
    %v431 = vlaneseq
    %v432 = vshrl.u32 %v431, 7
    %v433 = vsub.s32 3, %v432
    %v434 = vrot.slane %v291, %v433
    %v435 = vlaneseq
    %v436 = vshrl.u32 %v435, 7
    %v437 = vsub.s32 4, %v436
    %v438 = vrot.slane %v291, %v437
    %v439 = vlaneseq
    %v440 = vshrl.u32 %v439, 7
    %v441 = vsub.s32 5, %v440
    %v442 = vrot.slane %v291, %v441
    %v443 = vlaneseq
    %v444 = vshrl.u32 %v443, 7
    %v445 = vsub.s32 6, %v444
    %v446 = vrot.slane %v291, %v445
    %v447 = vlaneseq
    %v448 = vshrl.u32 %v447, 7
    %v449 = vsub.s32 7, %v448
    %v450 = vrot.slane %v291, %v449
    %v451 = vlaneseq
    %v452 = vshrl.u32 %v451, 7
    %v453 = vsub.s32 0, %v452
    %v454 = vrot.slane %v292, %v453
    %v455 = vlaneseq
    %v456 = vshrl.u32 %v455, 7
    %v457 = vsub.s32 1, %v456
    %v458 = vrot.slane %v292, %v457
    %v459 = vlaneseq
    %v460 = vshrl.u32 %v459, 7
    %v461 = vsub.s32 2, %v460
    %v462 = vrot.slane %v292, %v461
    %v463 = vlaneseq
    %v464 = vshrl.u32 %v463, 7
    %v465 = vsub.s32 3, %v464
    %v466 = vrot.slane %v292, %v465
    %v467 = vlaneseq
    %v468 = vshrl.u32 %v467, 7
    %v469 = vsub.s32 4, %v468
    %v470 = vrot.slane %v292, %v469
    %v471 = vlaneseq
    %v472 = vshrl.u32 %v471, 7
    %v473 = vsub.s32 5, %v472
    %v474 = vrot.slane %v292, %v473
    %v475 = vlaneseq
    %v476 = vshrl.u32 %v475, 7
    %v477 = vsub.s32 6, %v476
    %v478 = vrot.slane %v292, %v477
    %v479 = vlaneseq
    %v480 = vshrl.u32 %v479, 7
    %v481 = vsub.s32 7, %v480
    %v482 = vrot.slane %v292, %v481
    %v483 = vlaneseq
    %v484 = vshrl.u32 %v483, 7
    %v485 = vsub.s32 0, %v484
    %v486 = vrot.slane %v293, %v485
    %v487 = vlaneseq
    %v488 = vshrl.u32 %v487, 7
    %v489 = vsub.s32 1, %v488
    %v490 = vrot.slane %v293, %v489
    %v491 = vlaneseq
    %v492 = vshrl.u32 %v491, 7
    %v493 = vsub.s32 2, %v492
    %v494 = vrot.slane %v293, %v493
    %v495 = vlaneseq
    %v496 = vshrl.u32 %v495, 7
    %v497 = vsub.s32 3, %v496
    %v498 = vrot.slane %v293, %v497
    %v499 = vlaneseq
    %v500 = vshrl.u32 %v499, 7
    %v501 = vsub.s32 4, %v500
    %v502 = vrot.slane %v293, %v501
    %v503 = vlaneseq
    %v504 = vshrl.u32 %v503, 7
    %v505 = vsub.s32 5, %v504
    %v506 = vrot.slane %v293, %v505
    %v507 = vlaneseq
    %v508 = vshrl.u32 %v507, 7
    %v509 = vsub.s32 6, %v508
    %v510 = vrot.slane %v293, %v509
    %v511 = vlaneseq
    %v512 = vshrl.u32 %v511, 7
    %v513 = vsub.s32 7, %v512
    %v514 = vrot.slane %v293, %v513
    %v515 = vlaneseq
    %v516 = vshrl.u32 %v515, 7
    %v517 = vsub.s32 0, %v516
    %v518 = vrot.slane %v294, %v517
    %v519 = vlaneseq
    %v520 = vshrl.u32 %v519, 7
    %v521 = vsub.s32 1, %v520
    %v522 = vrot.slane %v294, %v521
    %v523 = vlaneseq
    %v524 = vshrl.u32 %v523, 7
    %v525 = vsub.s32 2, %v524
    %v526 = vrot.slane %v294, %v525
    %v527 = vlaneseq
    %v528 = vshrl.u32 %v527, 7
    %v529 = vsub.s32 3, %v528
    %v530 = vrot.slane %v294, %v529
    %v531 = vlaneseq
    %v532 = vshrl.u32 %v531, 7
    %v533 = vsub.s32 4, %v532
    %v534 = vrot.slane %v294, %v533
    %v535 = vlaneseq
    %v536 = vshrl.u32 %v535, 7
    %v537 = vsub.s32 5, %v536
    %v538 = vrot.slane %v294, %v537
    %v539 = vlaneseq
    %v540 = vshrl.u32 %v539, 7
    %v541 = vsub.s32 6, %v540
    %v542 = vrot.slane %v294, %v541
    %v543 = vlaneseq
    %v544 = vshrl.u32 %v543, 7
    %v545 = vsub.s32 7, %v544
    %v546 = vrot.slane %v294, %v545
    %v547 = vlaneseq
    %v548 = vshrl.u32 %v547, 7
    %v549 = vsub.s32 0, %v548
    %v550 = vrot.slane %v295, %v549
    %v551 = vlaneseq
    %v552 = vshrl.u32 %v551, 7
    %v553 = vsub.s32 1, %v552
    %v554 = vrot.slane %v295, %v553
    %v555 = vlaneseq
    %v556 = vshrl.u32 %v555, 7
    %v557 = vsub.s32 2, %v556
    %v558 = vrot.slane %v295, %v557
    %v559 = vlaneseq
    %v560 = vshrl.u32 %v559, 7
    %v561 = vsub.s32 3, %v560
    %v562 = vrot.slane %v295, %v561
    %v563 = vlaneseq
    %v564 = vshrl.u32 %v563, 7
    %v565 = vsub.s32 4, %v564
    %v566 = vrot.slane %v295, %v565
    %v567 = vlaneseq
    %v568 = vshrl.u32 %v567, 7
    %v569 = vsub.s32 5, %v568
    %v570 = vrot.slane %v295, %v569
    %v571 = vlaneseq
    %v572 = vshrl.u32 %v571, 7
    %v573 = vsub.s32 6, %v572
    %v574 = vrot.slane %v295, %v573
    %v575 = vlaneseq
    %v576 = vshrl.u32 %v575, 7
    %v577 = vsub.s32 7, %v576
    %v578 = vrot.slane %v295, %v577
    %v579 = vlaneseq
    %v580 = vshrl.u32 %v579, 7
    %v581 = vsub.s32 0, %v580
    %v582 = vrot.slane %v296, %v581
    %v583 = vlaneseq
    %v584 = vshrl.u32 %v583, 7
    %v585 = vsub.s32 1, %v584
    %v586 = vrot.slane %v296, %v585
    %v587 = vlaneseq
    %v588 = vshrl.u32 %v587, 7
    %v589 = vsub.s32 2, %v588
    %v590 = vrot.slane %v296, %v589
    %v591 = vlaneseq
    %v592 = vshrl.u32 %v591, 7
    %v593 = vsub.s32 3, %v592
    %v594 = vrot.slane %v296, %v593
    %v595 = vlaneseq
    %v596 = vshrl.u32 %v595, 7
    %v597 = vsub.s32 4, %v596
    %v598 = vrot.slane %v296, %v597
    %v599 = vlaneseq
    %v600 = vshrl.u32 %v599, 7
    %v601 = vsub.s32 5, %v600
    %v602 = vrot.slane %v296, %v601
    %v603 = vlaneseq
    %v604 = vshrl.u32 %v603, 7
    %v605 = vsub.s32 6, %v604
    %v606 = vrot.slane %v296, %v605
    %v607 = vlaneseq
    %v608 = vshrl.u32 %v607, 7
    %v609 = vsub.s32 7, %v608
    %v610 = vrot.slane %v296, %v609
    %v611 = vlaneseq
    %v612 = vshrl.u32 %v611, 7
    %v613 = vsub.s32 0, %v612
    %v614 = vrot.slane %v297, %v613
    %v615 = vlaneseq
    %v616 = vshrl.u32 %v615, 7
    %v617 = vsub.s32 1, %v616
    %v618 = vrot.slane %v297, %v617
    %v619 = vlaneseq
    %v620 = vshrl.u32 %v619, 7
    %v621 = vsub.s32 2, %v620
    %v622 = vrot.slane %v297, %v621
    %v623 = vlaneseq
    %v624 = vshrl.u32 %v623, 7
    %v625 = vsub.s32 3, %v624
    %v626 = vrot.slane %v297, %v625
    %v627 = vlaneseq
    %v628 = vshrl.u32 %v627, 7
    %v629 = vsub.s32 4, %v628
    %v630 = vrot.slane %v297, %v629
    %v631 = vlaneseq
    %v632 = vshrl.u32 %v631, 7
    %v633 = vsub.s32 5, %v632
    %v634 = vrot.slane %v297, %v633
    %v635 = vlaneseq
    %v636 = vshrl.u32 %v635, 7
    %v637 = vsub.s32 6, %v636
    %v638 = vrot.slane %v297, %v637
    %v639 = vlaneseq
    %v640 = vshrl.u32 %v639, 7
    %v641 = vsub.s32 7, %v640
    %v642 = vrot.slane %v297, %v641
    %v643 = vlaneseq
    %v644 = vshrl.u32 %v643, 7
    %v645 = vsub.s32 0, %v644
    %v646 = vrot.slane %v298, %v645
    %v647 = vlaneseq
    %v648 = vshrl.u32 %v647, 7
    %v649 = vsub.s32 1, %v648
    %v650 = vrot.slane %v298, %v649
    %v651 = vlaneseq
    %v652 = vshrl.u32 %v651, 7
    %v653 = vsub.s32 2, %v652
    %v654 = vrot.slane %v298, %v653
    %v655 = vlaneseq
    %v656 = vshrl.u32 %v655, 7
    %v657 = vsub.s32 3, %v656
    %v658 = vrot.slane %v298, %v657
    %v659 = vlaneseq
    %v660 = vshrl.u32 %v659, 7
    %v661 = vsub.s32 4, %v660
    %v662 = vrot.slane %v298, %v661
    %v663 = vlaneseq
    %v664 = vshrl.u32 %v663, 7
    %v665 = vsub.s32 5, %v664
    %v666 = vrot.slane %v298, %v665
    %v667 = vlaneseq
    %v668 = vshrl.u32 %v667, 7
    %v669 = vsub.s32 6, %v668
    %v670 = vrot.slane %v298, %v669
    %v671 = vlaneseq
    %v672 = vshrl.u32 %v671, 7
    %v673 = vsub.s32 7, %v672
    %v674 = vrot.slane %v298, %v673
    %v675 = vlaneseq
    %v676 = vshrl.u32 %v675, 7
    %v677 = vsub.s32 0, %v676
    %v678 = vrot.slane %v299, %v677
    %v679 = vlaneseq
    %v680 = vshrl.u32 %v679, 7
    %v681 = vsub.s32 1, %v680
    %v682 = vrot.slane %v299, %v681
    %v683 = vlaneseq
    %v684 = vshrl.u32 %v683, 7
    %v685 = vsub.s32 2, %v684
    %v686 = vrot.slane %v299, %v685
    %v687 = vlaneseq
    %v688 = vshrl.u32 %v687, 7
    %v689 = vsub.s32 3, %v688
    %v690 = vrot.slane %v299, %v689
    %v691 = vlaneseq
    %v692 = vshrl.u32 %v691, 7
    %v693 = vsub.s32 4, %v692
    %v694 = vrot.slane %v299, %v693
    %v695 = vlaneseq
    %v696 = vshrl.u32 %v695, 7
    %v697 = vsub.s32 5, %v696
    %v698 = vrot.slane %v299, %v697
    %v699 = vlaneseq
    %v700 = vshrl.u32 %v699, 7
    %v701 = vsub.s32 6, %v700
    %v702 = vrot.slane %v299, %v701
    %v703 = vlaneseq
    %v704 = vshrl.u32 %v703, 7
    %v705 = vsub.s32 7, %v704
    %v706 = vrot.slane %v299, %v705
    %v707 = vlaneseq
    %v708 = vshrl.u32 %v707, 7
    %v709 = vsub.s32 0, %v708
    %v710 = vrot.slane %v300, %v709
    %v711 = vlaneseq
    %v712 = vshrl.u32 %v711, 7
    %v713 = vsub.s32 1, %v712
    %v714 = vrot.slane %v300, %v713
    %v715 = vlaneseq
    %v716 = vshrl.u32 %v715, 7
    %v717 = vsub.s32 2, %v716
    %v718 = vrot.slane %v300, %v717
    %v719 = vlaneseq
    %v720 = vshrl.u32 %v719, 7
    %v721 = vsub.s32 3, %v720
    %v722 = vrot.slane %v300, %v721
    %v723 = vlaneseq
    %v724 = vshrl.u32 %v723, 7
    %v725 = vsub.s32 4, %v724
    %v726 = vrot.slane %v300, %v725
    %v727 = vlaneseq
    %v728 = vshrl.u32 %v727, 7
    %v729 = vsub.s32 5, %v728
    %v730 = vrot.slane %v300, %v729
    %v731 = vlaneseq
    %v732 = vshrl.u32 %v731, 7
    %v733 = vsub.s32 6, %v732
    %v734 = vrot.slane %v300, %v733
    %v735 = vlaneseq
    %v736 = vshrl.u32 %v735, 7
    %v737 = vsub.s32 7, %v736
    %v738 = vrot.slane %v300, %v737
    %v739 = vlaneseq
    %v740 = vshrl.u32 %v739, 7
    %v741 = vsub.s32 0, %v740
    %v742 = vrot.slane %v301, %v741
    %v743 = vlaneseq
    %v744 = vshrl.u32 %v743, 7
    %v745 = vsub.s32 1, %v744
    %v746 = vrot.slane %v301, %v745
    %v747 = vlaneseq
    %v748 = vshrl.u32 %v747, 7
    %v749 = vsub.s32 2, %v748
    %v750 = vrot.slane %v301, %v749
    %v751 = vlaneseq
    %v752 = vshrl.u32 %v751, 7
    %v753 = vsub.s32 3, %v752
    %v754 = vrot.slane %v301, %v753
    %v755 = vlaneseq
    %v756 = vshrl.u32 %v755, 7
    %v757 = vsub.s32 4, %v756
    %v758 = vrot.slane %v301, %v757
    %v759 = vlaneseq
    %v760 = vshrl.u32 %v759, 7
    %v761 = vsub.s32 5, %v760
    %v762 = vrot.slane %v301, %v761
    %v763 = vlaneseq
    %v764 = vshrl.u32 %v763, 7
    %v765 = vsub.s32 6, %v764
    %v766 = vrot.slane %v301, %v765
    %v767 = vlaneseq
    %v768 = vshrl.u32 %v767, 7
    %v769 = vsub.s32 7, %v768
    %v770 = vrot.slane %v301, %v769
    %v771 = vlaneseq
    %v772 = vshrl.u32 %v771, 7
    %v773 = vsub.s32 0, %v772
    %v774 = vrot.slane %v302, %v773
    %v775 = vlaneseq
    %v776 = vshrl.u32 %v775, 7
    %v777 = vsub.s32 1, %v776
    %v778 = vrot.slane %v302, %v777
    %v779 = vlaneseq
    %v780 = vshrl.u32 %v779, 7
    %v781 = vsub.s32 2, %v780
    %v782 = vrot.slane %v302, %v781
    %v783 = vlaneseq
    %v784 = vshrl.u32 %v783, 7
    %v785 = vsub.s32 3, %v784
    %v786 = vrot.slane %v302, %v785
    %v787 = vlaneseq
    %v788 = vshrl.u32 %v787, 7
    %v789 = vsub.s32 4, %v788
    %v790 = vrot.slane %v302, %v789
    %v791 = vlaneseq
    %v792 = vshrl.u32 %v791, 7
    %v793 = vsub.s32 5, %v792
    %v794 = vrot.slane %v302, %v793
    %v795 = vlaneseq
    %v796 = vshrl.u32 %v795, 7
    %v797 = vsub.s32 6, %v796
    %v798 = vrot.slane %v302, %v797
    %v799 = vlaneseq
    %v800 = vshrl.u32 %v799, 7
    %v801 = vsub.s32 7, %v800
    %v802 = vrot.slane %v302, %v801
    %v803 = vlaneseq
    %v804 = vshrl.u32 %v803, 7
    %v805 = vsub.s32 0, %v804
    %v806 = vrot.slane %v303, %v805
    %v807 = vlaneseq
    %v808 = vshrl.u32 %v807, 7
    %v809 = vsub.s32 1, %v808
    %v810 = vrot.slane %v303, %v809
    %v811 = vlaneseq
    %v812 = vshrl.u32 %v811, 7
    %v813 = vsub.s32 2, %v812
    %v814 = vrot.slane %v303, %v813
    %v815 = vlaneseq
    %v816 = vshrl.u32 %v815, 7
    %v817 = vsub.s32 3, %v816
    %v818 = vrot.slane %v303, %v817
    %v819 = vlaneseq
    %v820 = vshrl.u32 %v819, 7
    %v821 = vsub.s32 4, %v820
    %v822 = vrot.slane %v303, %v821
    %v823 = vlaneseq
    %v824 = vshrl.u32 %v823, 7
    %v825 = vsub.s32 5, %v824
    %v826 = vrot.slane %v303, %v825
    %v827 = vlaneseq
    %v828 = vshrl.u32 %v827, 7
    %v829 = vsub.s32 6, %v828
    %v830 = vrot.slane %v303, %v829
    %v831 = vlaneseq
    %v832 = vshrl.u32 %v831, 7
    %v833 = vsub.s32 7, %v832
    %v834 = vrot.slane %v303, %v833
    %v835 = vlaneseq
    %v836 = vshrl.u32 %v835, 7
    %v837 = vsub.s32 0, %v836
    %v838 = vrot.slane %v304, %v837
    %v839 = vlaneseq
    %v840 = vshrl.u32 %v839, 7
    %v841 = vsub.s32 1, %v840
    %v842 = vrot.slane %v304, %v841
    %v843 = vlaneseq
    %v844 = vshrl.u32 %v843, 7
    %v845 = vsub.s32 2, %v844
    %v846 = vrot.slane %v304, %v845
    %v847 = vlaneseq
    %v848 = vshrl.u32 %v847, 7
    %v849 = vsub.s32 3, %v848
    %v850 = vrot.slane %v304, %v849
    %v851 = vlaneseq
    %v852 = vshrl.u32 %v851, 7
    %v853 = vsub.s32 4, %v852
    %v854 = vrot.slane %v304, %v853
    %v855 = vlaneseq
    %v856 = vshrl.u32 %v855, 7
    %v857 = vsub.s32 5, %v856
    %v858 = vrot.slane %v304, %v857
    %v859 = vlaneseq
    %v860 = vshrl.u32 %v859, 7
    %v861 = vsub.s32 6, %v860
    %v862 = vrot.slane %v304, %v861
    %v863 = vlaneseq
    %v864 = vshrl.u32 %v863, 7
    %v865 = vsub.s32 7, %v864
    %v866 = vrot.slane %v304, %v865
    %v867 = vlaneseq
    %v868 = vshrl.u32 %v867, 7
    %v869 = vsub.s32 0, %v868
    %v870 = vrot.slane %v305, %v869
    %v871 = vlaneseq
    %v872 = vshrl.u32 %v871, 7
    %v873 = vsub.s32 1, %v872
    %v874 = vrot.slane %v305, %v873
    %v875 = vlaneseq
    %v876 = vshrl.u32 %v875, 7
    %v877 = vsub.s32 2, %v876
    %v878 = vrot.slane %v305, %v877
    %v879 = vlaneseq
    %v880 = vshrl.u32 %v879, 7
    %v881 = vsub.s32 3, %v880
    %v882 = vrot.slane %v305, %v881
    %v883 = vlaneseq
    %v884 = vshrl.u32 %v883, 7
    %v885 = vsub.s32 4, %v884
    %v886 = vrot.slane %v305, %v885
    %v887 = vlaneseq
    %v888 = vshrl.u32 %v887, 7
    %v889 = vsub.s32 5, %v888
    %v890 = vrot.slane %v305, %v889
    %v891 = vlaneseq
    %v892 = vshrl.u32 %v891, 7
    %v893 = vsub.s32 6, %v892
    %v894 = vrot.slane %v305, %v893
    %v895 = vlaneseq
    %v896 = vshrl.u32 %v895, 7
    %v897 = vsub.s32 7, %v896
    %v898 = vrot.slane %v305, %v897
    %v899 = vcombine.low %v390, %v394
    %v900 = vcombine.low %v398, %v402
    %v901 = vcombine.low %v406, %v410
    %v902 = vcombine.low %v414, %v418
    %v904 = vunpack.c.l.s4 1966171168
    %v905 = vunpack.c.0.s8 %v904
    %v906 = vlaneseq
    %v907 = vshrl.u32 %v906, 7
    %v908 = vsub.s32 %v905, %v907
    %v909 = vrot.slane %v899, %v908
    %v911 = vunpack.c.l.s4 1966171168
    %v912 = vunpack.c.0.s8 %v911
    %v913 = vlaneseq
    %v914 = vshrl.u32 %v913, 7
    %v915 = vsub.s32 %v912, %v914
    %v916 = vrot.slane %v900, %v915
    %v918 = vunpack.c.l.s4 1966171168
    %v919 = vunpack.c.0.s8 %v918
    %v920 = vlaneseq
    %v921 = vshrl.u32 %v920, 7
    %v922 = vsub.s32 %v919, %v921
    %v923 = vrot.slane %v901, %v922
    %v925 = vunpack.c.l.s4 1966171168
    %v926 = vunpack.c.0.s8 %v925
    %v927 = vlaneseq
    %v928 = vshrl.u32 %v927, 7
    %v929 = vsub.s32 %v926, %v928
    %v930 = vrot.slane %v902, %v929
    %v931 = vcombine.low %v909, %v916
    %v932 = vcombine.low %v923, %v930
    %v934 = vunpack.c.l.s4 1966171168
    %v935 = vunpack.c.0.s8 %v934
    %v936 = vlaneseq
    %v937 = vshrl.u32 %v936, 7
    %v938 = vsub.s32 %v935, %v937
    %v939 = vrot.slane %v931, %v938
    %v941 = vunpack.c.l.s4 1966171168
    %v942 = vunpack.c.0.s8 %v941
    %v943 = vlaneseq
    %v944 = vshrl.u32 %v943, 7
    %v945 = vsub.s32 %v942, %v944
    %v946 = vrot.slane %v932, %v945
    %v947 = vcombine.low %v939, %v946
    %v948 = vcombine.low %v422, %v426
    %v949 = vcombine.low %v430, %v434
    %v950 = vcombine.low %v438, %v442
    %v951 = vcombine.low %v446, %v450
    %v953 = vunpack.c.l.s4 1966171168
    %v954 = vunpack.c.0.s8 %v953
    %v955 = vlaneseq
    %v956 = vshrl.u32 %v955, 7
    %v957 = vsub.s32 %v954, %v956
    %v958 = vrot.slane %v948, %v957
    %v960 = vunpack.c.l.s4 1966171168
    %v961 = vunpack.c.0.s8 %v960
    %v962 = vlaneseq
    %v963 = vshrl.u32 %v962, 7
    %v964 = vsub.s32 %v961, %v963
    %v965 = vrot.slane %v949, %v964
    %v967 = vunpack.c.l.s4 1966171168
    %v968 = vunpack.c.0.s8 %v967
    %v969 = vlaneseq
    %v970 = vshrl.u32 %v969, 7
    %v971 = vsub.s32 %v968, %v970
    %v972 = vrot.slane %v950, %v971
    %v974 = vunpack.c.l.s4 1966171168
    %v975 = vunpack.c.0.s8 %v974
    %v976 = vlaneseq
    %v977 = vshrl.u32 %v976, 7
    %v978 = vsub.s32 %v975, %v977
    %v979 = vrot.slane %v951, %v978
    %v980 = vcombine.low %v958, %v965
    %v981 = vcombine.low %v972, %v979
    %v983 = vunpack.c.l.s4 1966171168
    %v984 = vunpack.c.0.s8 %v983
    %v985 = vlaneseq
    %v986 = vshrl.u32 %v985, 7
    %v987 = vsub.s32 %v984, %v986
    %v988 = vrot.slane %v980, %v987
    %v990 = vunpack.c.l.s4 1966171168
    %v991 = vunpack.c.0.s8 %v990
    %v992 = vlaneseq
    %v993 = vshrl.u32 %v992, 7
    %v994 = vsub.s32 %v991, %v993
    %v995 = vrot.slane %v981, %v994
    %v996 = vcombine.low %v988, %v995
    %v997 = vcombine.low %v454, %v458
    %v998 = vcombine.low %v462, %v466
    %v999 = vcombine.low %v470, %v474
    %v1000 = vcombine.low %v478, %v482
    %v1002 = vunpack.c.l.s4 1966171168
    %v1003 = vunpack.c.0.s8 %v1002
    %v1004 = vlaneseq
    %v1005 = vshrl.u32 %v1004, 7
    %v1006 = vsub.s32 %v1003, %v1005
    %v1007 = vrot.slane %v997, %v1006
    %v1009 = vunpack.c.l.s4 1966171168
    %v1010 = vunpack.c.0.s8 %v1009
    %v1011 = vlaneseq
    %v1012 = vshrl.u32 %v1011, 7
    %v1013 = vsub.s32 %v1010, %v1012
    %v1014 = vrot.slane %v998, %v1013
    %v1016 = vunpack.c.l.s4 1966171168
    %v1017 = vunpack.c.0.s8 %v1016
    %v1018 = vlaneseq
    %v1019 = vshrl.u32 %v1018, 7
    %v1020 = vsub.s32 %v1017, %v1019
    %v1021 = vrot.slane %v999, %v1020
    %v1023 = vunpack.c.l.s4 1966171168
    %v1024 = vunpack.c.0.s8 %v1023
    %v1025 = vlaneseq
    %v1026 = vshrl.u32 %v1025, 7
    %v1027 = vsub.s32 %v1024, %v1026
    %v1028 = vrot.slane %v1000, %v1027
    %v1029 = vcombine.low %v1007, %v1014
    %v1030 = vcombine.low %v1021, %v1028
    %v1032 = vunpack.c.l.s4 1966171168
    %v1033 = vunpack.c.0.s8 %v1032
    %v1034 = vlaneseq
    %v1035 = vshrl.u32 %v1034, 7
    %v1036 = vsub.s32 %v1033, %v1035
    %v1037 = vrot.slane %v1029, %v1036
    %v1039 = vunpack.c.l.s4 1966171168
    %v1040 = vunpack.c.0.s8 %v1039
    %v1041 = vlaneseq
    %v1042 = vshrl.u32 %v1041, 7
    %v1043 = vsub.s32 %v1040, %v1042
    %v1044 = vrot.slane %v1030, %v1043
    %v1045 = vcombine.low %v1037, %v1044
    %v1046 = vcombine.low %v486, %v490
    %v1047 = vcombine.low %v494, %v498
    %v1048 = vcombine.low %v502, %v506
    %v1049 = vcombine.low %v510, %v514
    %v1051 = vunpack.c.l.s4 1966171168
    %v1052 = vunpack.c.0.s8 %v1051
    %v1053 = vlaneseq
    %v1054 = vshrl.u32 %v1053, 7
    %v1055 = vsub.s32 %v1052, %v1054
    %v1056 = vrot.slane %v1046, %v1055
    %v1058 = vunpack.c.l.s4 1966171168
    %v1059 = vunpack.c.0.s8 %v1058
    %v1060 = vlaneseq
    %v1061 = vshrl.u32 %v1060, 7
    %v1062 = vsub.s32 %v1059, %v1061
    %v1063 = vrot.slane %v1047, %v1062
    %v1065 = vunpack.c.l.s4 1966171168
    %v1066 = vunpack.c.0.s8 %v1065
    %v1067 = vlaneseq
    %v1068 = vshrl.u32 %v1067, 7
    %v1069 = vsub.s32 %v1066, %v1068
    %v1070 = vrot.slane %v1048, %v1069
    %v1072 = vunpack.c.l.s4 1966171168
    %v1073 = vunpack.c.0.s8 %v1072
    %v1074 = vlaneseq
    %v1075 = vshrl.u32 %v1074, 7
    %v1076 = vsub.s32 %v1073, %v1075
    %v1077 = vrot.slane %v1049, %v1076
    %v1078 = vcombine.low %v1056, %v1063
    %v1079 = vcombine.low %v1070, %v1077
    %v1081 = vunpack.c.l.s4 1966171168
    %v1082 = vunpack.c.0.s8 %v1081
    %v1083 = vlaneseq
    %v1084 = vshrl.u32 %v1083, 7
    %v1085 = vsub.s32 %v1082, %v1084
    %v1086 = vrot.slane %v1078, %v1085
    %v1088 = vunpack.c.l.s4 1966171168
    %v1089 = vunpack.c.0.s8 %v1088
    %v1090 = vlaneseq
    %v1091 = vshrl.u32 %v1090, 7
    %v1092 = vsub.s32 %v1089, %v1091
    %v1093 = vrot.slane %v1079, %v1092
    %v1094 = vcombine.low %v1086, %v1093
    %v1095 = vcombine.low %v518, %v522
    %v1096 = vcombine.low %v526, %v530
    %v1097 = vcombine.low %v534, %v538
    %v1098 = vcombine.low %v542, %v546
    %v1100 = vunpack.c.l.s4 1966171168
    %v1101 = vunpack.c.0.s8 %v1100
    %v1102 = vlaneseq
    %v1103 = vshrl.u32 %v1102, 7
    %v1104 = vsub.s32 %v1101, %v1103
    %v1105 = vrot.slane %v1095, %v1104
    %v1107 = vunpack.c.l.s4 1966171168
    %v1108 = vunpack.c.0.s8 %v1107
    %v1109 = vlaneseq
    %v1110 = vshrl.u32 %v1109, 7
    %v1111 = vsub.s32 %v1108, %v1110
    %v1112 = vrot.slane %v1096, %v1111
    %v1114 = vunpack.c.l.s4 1966171168
    %v1115 = vunpack.c.0.s8 %v1114
    %v1116 = vlaneseq
    %v1117 = vshrl.u32 %v1116, 7
    %v1118 = vsub.s32 %v1115, %v1117
    %v1119 = vrot.slane %v1097, %v1118
    %v1121 = vunpack.c.l.s4 1966171168
    %v1122 = vunpack.c.0.s8 %v1121
    %v1123 = vlaneseq
    %v1124 = vshrl.u32 %v1123, 7
    %v1125 = vsub.s32 %v1122, %v1124
    %v1126 = vrot.slane %v1098, %v1125
    %v1127 = vcombine.low %v1105, %v1112
    %v1128 = vcombine.low %v1119, %v1126
    %v1130 = vunpack.c.l.s4 1966171168
    %v1131 = vunpack.c.0.s8 %v1130
    %v1132 = vlaneseq
    %v1133 = vshrl.u32 %v1132, 7
    %v1134 = vsub.s32 %v1131, %v1133
    %v1135 = vrot.slane %v1127, %v1134
    %v1137 = vunpack.c.l.s4 1966171168
    %v1138 = vunpack.c.0.s8 %v1137
    %v1139 = vlaneseq
    %v1140 = vshrl.u32 %v1139, 7
    %v1141 = vsub.s32 %v1138, %v1140
    %v1142 = vrot.slane %v1128, %v1141
    %v1143 = vcombine.low %v1135, %v1142
    %v1144 = vcombine.low %v550, %v554
    %v1145 = vcombine.low %v558, %v562
    %v1146 = vcombine.low %v566, %v570
    %v1147 = vcombine.low %v574, %v578
    %v1149 = vunpack.c.l.s4 1966171168
    %v1150 = vunpack.c.0.s8 %v1149
    %v1151 = vlaneseq
    %v1152 = vshrl.u32 %v1151, 7
    %v1153 = vsub.s32 %v1150, %v1152
    %v1154 = vrot.slane %v1144, %v1153
    %v1156 = vunpack.c.l.s4 1966171168
    %v1157 = vunpack.c.0.s8 %v1156
    %v1158 = vlaneseq
    %v1159 = vshrl.u32 %v1158, 7
    %v1160 = vsub.s32 %v1157, %v1159
    %v1161 = vrot.slane %v1145, %v1160
    %v1163 = vunpack.c.l.s4 1966171168
    %v1164 = vunpack.c.0.s8 %v1163
    %v1165 = vlaneseq
    %v1166 = vshrl.u32 %v1165, 7
    %v1167 = vsub.s32 %v1164, %v1166
    %v1168 = vrot.slane %v1146, %v1167
    %v1170 = vunpack.c.l.s4 1966171168
    %v1171 = vunpack.c.0.s8 %v1170
    %v1172 = vlaneseq
    %v1173 = vshrl.u32 %v1172, 7
    %v1174 = vsub.s32 %v1171, %v1173
    %v1175 = vrot.slane %v1147, %v1174
    %v1176 = vcombine.low %v1154, %v1161
    %v1177 = vcombine.low %v1168, %v1175
    %v1179 = vunpack.c.l.s4 1966171168
    %v1180 = vunpack.c.0.s8 %v1179
    %v1181 = vlaneseq
    %v1182 = vshrl.u32 %v1181, 7
    %v1183 = vsub.s32 %v1180, %v1182
    %v1184 = vrot.slane %v1176, %v1183
    %v1186 = vunpack.c.l.s4 1966171168
    %v1187 = vunpack.c.0.s8 %v1186
    %v1188 = vlaneseq
    %v1189 = vshrl.u32 %v1188, 7
    %v1190 = vsub.s32 %v1187, %v1189
    %v1191 = vrot.slane %v1177, %v1190
    %v1192 = vcombine.low %v1184, %v1191
    %v1193 = vcombine.low %v582, %v586
    %v1194 = vcombine.low %v590, %v594
    %v1195 = vcombine.low %v598, %v602
    %v1196 = vcombine.low %v606, %v610
    %v1198 = vunpack.c.l.s4 1966171168
    %v1199 = vunpack.c.0.s8 %v1198
    %v1200 = vlaneseq
    %v1201 = vshrl.u32 %v1200, 7
    %v1202 = vsub.s32 %v1199, %v1201
    %v1203 = vrot.slane %v1193, %v1202
    %v1205 = vunpack.c.l.s4 1966171168
    %v1206 = vunpack.c.0.s8 %v1205
    %v1207 = vlaneseq
    %v1208 = vshrl.u32 %v1207, 7
    %v1209 = vsub.s32 %v1206, %v1208
    %v1210 = vrot.slane %v1194, %v1209
    %v1212 = vunpack.c.l.s4 1966171168
    %v1213 = vunpack.c.0.s8 %v1212
    %v1214 = vlaneseq
    %v1215 = vshrl.u32 %v1214, 7
    %v1216 = vsub.s32 %v1213, %v1215
    %v1217 = vrot.slane %v1195, %v1216
    %v1219 = vunpack.c.l.s4 1966171168
    %v1220 = vunpack.c.0.s8 %v1219
    %v1221 = vlaneseq
    %v1222 = vshrl.u32 %v1221, 7
    %v1223 = vsub.s32 %v1220, %v1222
    %v1224 = vrot.slane %v1196, %v1223
    %v1225 = vcombine.low %v1203, %v1210
    %v1226 = vcombine.low %v1217, %v1224
    %v1228 = vunpack.c.l.s4 1966171168
    %v1229 = vunpack.c.0.s8 %v1228
    %v1230 = vlaneseq
    %v1231 = vshrl.u32 %v1230, 7
    %v1232 = vsub.s32 %v1229, %v1231
    %v1233 = vrot.slane %v1225, %v1232
    %v1235 = vunpack.c.l.s4 1966171168
    %v1236 = vunpack.c.0.s8 %v1235
    %v1237 = vlaneseq
    %v1238 = vshrl.u32 %v1237, 7
    %v1239 = vsub.s32 %v1236, %v1238
    %v1240 = vrot.slane %v1226, %v1239
    %v1241 = vcombine.low %v1233, %v1240
    %v1242 = vcombine.low %v614, %v618
    %v1243 = vcombine.low %v622, %v626
    %v1244 = vcombine.low %v630, %v634
    %v1245 = vcombine.low %v638, %v642
    %v1247 = vunpack.c.l.s4 1966171168
    %v1248 = vunpack.c.0.s8 %v1247
    %v1249 = vlaneseq
    %v1250 = vshrl.u32 %v1249, 7
    %v1251 = vsub.s32 %v1248, %v1250
    %v1252 = vrot.slane %v1242, %v1251
    %v1254 = vunpack.c.l.s4 1966171168
    %v1255 = vunpack.c.0.s8 %v1254
    %v1256 = vlaneseq
    %v1257 = vshrl.u32 %v1256, 7
    %v1258 = vsub.s32 %v1255, %v1257
    %v1259 = vrot.slane %v1243, %v1258
    %v1261 = vunpack.c.l.s4 1966171168
    %v1262 = vunpack.c.0.s8 %v1261
    %v1263 = vlaneseq
    %v1264 = vshrl.u32 %v1263, 7
    %v1265 = vsub.s32 %v1262, %v1264
    %v1266 = vrot.slane %v1244, %v1265
    %v1268 = vunpack.c.l.s4 1966171168
    %v1269 = vunpack.c.0.s8 %v1268
    %v1270 = vlaneseq
    %v1271 = vshrl.u32 %v1270, 7
    %v1272 = vsub.s32 %v1269, %v1271
    %v1273 = vrot.slane %v1245, %v1272
    %v1274 = vcombine.low %v1252, %v1259
    %v1275 = vcombine.low %v1266, %v1273
    %v1277 = vunpack.c.l.s4 1966171168
    %v1278 = vunpack.c.0.s8 %v1277
    %v1279 = vlaneseq
    %v1280 = vshrl.u32 %v1279, 7
    %v1281 = vsub.s32 %v1278, %v1280
    %v1282 = vrot.slane %v1274, %v1281
    %v1284 = vunpack.c.l.s4 1966171168
    %v1285 = vunpack.c.0.s8 %v1284
    %v1286 = vlaneseq
    %v1287 = vshrl.u32 %v1286, 7
    %v1288 = vsub.s32 %v1285, %v1287
    %v1289 = vrot.slane %v1275, %v1288
    %v1290 = vcombine.low %v1282, %v1289
    %v1291 = vcombine.low %v646, %v650
    %v1292 = vcombine.low %v654, %v658
    %v1293 = vcombine.low %v662, %v666
    %v1294 = vcombine.low %v670, %v674
    %v1296 = vunpack.c.l.s4 1966171168
    %v1297 = vunpack.c.0.s8 %v1296
    %v1298 = vlaneseq
    %v1299 = vshrl.u32 %v1298, 7
    %v1300 = vsub.s32 %v1297, %v1299
    %v1301 = vrot.slane %v1291, %v1300
    %v1303 = vunpack.c.l.s4 1966171168
    %v1304 = vunpack.c.0.s8 %v1303
    %v1305 = vlaneseq
    %v1306 = vshrl.u32 %v1305, 7
    %v1307 = vsub.s32 %v1304, %v1306
    %v1308 = vrot.slane %v1292, %v1307
    %v1310 = vunpack.c.l.s4 1966171168
    %v1311 = vunpack.c.0.s8 %v1310
    %v1312 = vlaneseq
    %v1313 = vshrl.u32 %v1312, 7
    %v1314 = vsub.s32 %v1311, %v1313
    %v1315 = vrot.slane %v1293, %v1314
    %v1317 = vunpack.c.l.s4 1966171168
    %v1318 = vunpack.c.0.s8 %v1317
    %v1319 = vlaneseq
    %v1320 = vshrl.u32 %v1319, 7
    %v1321 = vsub.s32 %v1318, %v1320
    %v1322 = vrot.slane %v1294, %v1321
    %v1323 = vcombine.low %v1301, %v1308
    %v1324 = vcombine.low %v1315, %v1322
    %v1326 = vunpack.c.l.s4 1966171168
    %v1327 = vunpack.c.0.s8 %v1326
    %v1328 = vlaneseq
    %v1329 = vshrl.u32 %v1328, 7
    %v1330 = vsub.s32 %v1327, %v1329
    %v1331 = vrot.slane %v1323, %v1330
    %v1333 = vunpack.c.l.s4 1966171168
    %v1334 = vunpack.c.0.s8 %v1333
    %v1335 = vlaneseq
    %v1336 = vshrl.u32 %v1335, 7
    %v1337 = vsub.s32 %v1334, %v1336
    %v1338 = vrot.slane %v1324, %v1337
    %v1339 = vcombine.low %v1331, %v1338
    %v1340 = vcombine.low %v678, %v682
    %v1341 = vcombine.low %v686, %v690
    %v1342 = vcombine.low %v694, %v698
    %v1343 = vcombine.low %v702, %v706
    %v1345 = vunpack.c.l.s4 1966171168
    %v1346 = vunpack.c.0.s8 %v1345
    %v1347 = vlaneseq
    %v1348 = vshrl.u32 %v1347, 7
    %v1349 = vsub.s32 %v1346, %v1348
    %v1350 = vrot.slane %v1340, %v1349
    %v1352 = vunpack.c.l.s4 1966171168
    %v1353 = vunpack.c.0.s8 %v1352
    %v1354 = vlaneseq
    %v1355 = vshrl.u32 %v1354, 7
    %v1356 = vsub.s32 %v1353, %v1355
    %v1357 = vrot.slane %v1341, %v1356
    %v1359 = vunpack.c.l.s4 1966171168
    %v1360 = vunpack.c.0.s8 %v1359
    %v1361 = vlaneseq
    %v1362 = vshrl.u32 %v1361, 7
    %v1363 = vsub.s32 %v1360, %v1362
    %v1364 = vrot.slane %v1342, %v1363
    %v1366 = vunpack.c.l.s4 1966171168
    %v1367 = vunpack.c.0.s8 %v1366
    %v1368 = vlaneseq
    %v1369 = vshrl.u32 %v1368, 7
    %v1370 = vsub.s32 %v1367, %v1369
    %v1371 = vrot.slane %v1343, %v1370
    %v1372 = vcombine.low %v1350, %v1357
    %v1373 = vcombine.low %v1364, %v1371
    %v1375 = vunpack.c.l.s4 1966171168
    %v1376 = vunpack.c.0.s8 %v1375
    %v1377 = vlaneseq
    %v1378 = vshrl.u32 %v1377, 7
    %v1379 = vsub.s32 %v1376, %v1378
    %v1380 = vrot.slane %v1372, %v1379
    %v1382 = vunpack.c.l.s4 1966171168
    %v1383 = vunpack.c.0.s8 %v1382
    %v1384 = vlaneseq
    %v1385 = vshrl.u32 %v1384, 7
    %v1386 = vsub.s32 %v1383, %v1385
    %v1387 = vrot.slane %v1373, %v1386
    %v1388 = vcombine.low %v1380, %v1387
    %v1389 = vcombine.low %v710, %v714
    %v1390 = vcombine.low %v718, %v722
    %v1391 = vcombine.low %v726, %v730
    %v1392 = vcombine.low %v734, %v738
    %v1394 = vunpack.c.l.s4 1966171168
    %v1395 = vunpack.c.0.s8 %v1394
    %v1396 = vlaneseq
    %v1397 = vshrl.u32 %v1396, 7
    %v1398 = vsub.s32 %v1395, %v1397
    %v1399 = vrot.slane %v1389, %v1398
    %v1401 = vunpack.c.l.s4 1966171168
    %v1402 = vunpack.c.0.s8 %v1401
    %v1403 = vlaneseq
    %v1404 = vshrl.u32 %v1403, 7
    %v1405 = vsub.s32 %v1402, %v1404
    %v1406 = vrot.slane %v1390, %v1405
    %v1408 = vunpack.c.l.s4 1966171168
    %v1409 = vunpack.c.0.s8 %v1408
    %v1410 = vlaneseq
    %v1411 = vshrl.u32 %v1410, 7
    %v1412 = vsub.s32 %v1409, %v1411
    %v1413 = vrot.slane %v1391, %v1412
    %v1415 = vunpack.c.l.s4 1966171168
    %v1416 = vunpack.c.0.s8 %v1415
    %v1417 = vlaneseq
    %v1418 = vshrl.u32 %v1417, 7
    %v1419 = vsub.s32 %v1416, %v1418
    %v1420 = vrot.slane %v1392, %v1419
    %v1421 = vcombine.low %v1399, %v1406
    %v1422 = vcombine.low %v1413, %v1420
    %v1424 = vunpack.c.l.s4 1966171168
    %v1425 = vunpack.c.0.s8 %v1424
    %v1426 = vlaneseq
    %v1427 = vshrl.u32 %v1426, 7
    %v1428 = vsub.s32 %v1425, %v1427
    %v1429 = vrot.slane %v1421, %v1428
    %v1431 = vunpack.c.l.s4 1966171168
    %v1432 = vunpack.c.0.s8 %v1431
    %v1433 = vlaneseq
    %v1434 = vshrl.u32 %v1433, 7
    %v1435 = vsub.s32 %v1432, %v1434
    %v1436 = vrot.slane %v1422, %v1435
    %v1437 = vcombine.low %v1429, %v1436
    %v1438 = vcombine.low %v742, %v746
    %v1439 = vcombine.low %v750, %v754
    %v1440 = vcombine.low %v758, %v762
    %v1441 = vcombine.low %v766, %v770
    %v1443 = vunpack.c.l.s4 1966171168
    %v1444 = vunpack.c.0.s8 %v1443
    %v1445 = vlaneseq
    %v1446 = vshrl.u32 %v1445, 7
    %v1447 = vsub.s32 %v1444, %v1446
    %v1448 = vrot.slane %v1438, %v1447
    %v1450 = vunpack.c.l.s4 1966171168
    %v1451 = vunpack.c.0.s8 %v1450
    %v1452 = vlaneseq
    %v1453 = vshrl.u32 %v1452, 7
    %v1454 = vsub.s32 %v1451, %v1453
    %v1455 = vrot.slane %v1439, %v1454
    %v1457 = vunpack.c.l.s4 1966171168
    %v1458 = vunpack.c.0.s8 %v1457
    %v1459 = vlaneseq
    %v1460 = vshrl.u32 %v1459, 7
    %v1461 = vsub.s32 %v1458, %v1460
    %v1462 = vrot.slane %v1440, %v1461
    %v1464 = vunpack.c.l.s4 1966171168
    %v1465 = vunpack.c.0.s8 %v1464
    %v1466 = vlaneseq
    %v1467 = vshrl.u32 %v1466, 7
    %v1468 = vsub.s32 %v1465, %v1467
    %v1469 = vrot.slane %v1441, %v1468
    %v1470 = vcombine.low %v1448, %v1455
    %v1471 = vcombine.low %v1462, %v1469
    %v1473 = vunpack.c.l.s4 1966171168
    %v1474 = vunpack.c.0.s8 %v1473
    %v1475 = vlaneseq
    %v1476 = vshrl.u32 %v1475, 7
    %v1477 = vsub.s32 %v1474, %v1476
    %v1478 = vrot.slane %v1470, %v1477
    %v1480 = vunpack.c.l.s4 1966171168
    %v1481 = vunpack.c.0.s8 %v1480
    %v1482 = vlaneseq
    %v1483 = vshrl.u32 %v1482, 7
    %v1484 = vsub.s32 %v1481, %v1483
    %v1485 = vrot.slane %v1471, %v1484
    %v1486 = vcombine.low %v1478, %v1485
    %v1487 = vcombine.low %v774, %v778
    %v1488 = vcombine.low %v782, %v786
    %v1489 = vcombine.low %v790, %v794
    %v1490 = vcombine.low %v798, %v802
    %v1492 = vunpack.c.l.s4 1966171168
    %v1493 = vunpack.c.0.s8 %v1492
    %v1494 = vlaneseq
    %v1495 = vshrl.u32 %v1494, 7
    %v1496 = vsub.s32 %v1493, %v1495
    %v1497 = vrot.slane %v1487, %v1496
    %v1499 = vunpack.c.l.s4 1966171168
    %v1500 = vunpack.c.0.s8 %v1499
    %v1501 = vlaneseq
    %v1502 = vshrl.u32 %v1501, 7
    %v1503 = vsub.s32 %v1500, %v1502
    %v1504 = vrot.slane %v1488, %v1503
    %v1506 = vunpack.c.l.s4 1966171168
    %v1507 = vunpack.c.0.s8 %v1506
    %v1508 = vlaneseq
    %v1509 = vshrl.u32 %v1508, 7
    %v1510 = vsub.s32 %v1507, %v1509
    %v1511 = vrot.slane %v1489, %v1510
    %v1513 = vunpack.c.l.s4 1966171168
    %v1514 = vunpack.c.0.s8 %v1513
    %v1515 = vlaneseq
    %v1516 = vshrl.u32 %v1515, 7
    %v1517 = vsub.s32 %v1514, %v1516
    %v1518 = vrot.slane %v1490, %v1517
    %v1519 = vcombine.low %v1497, %v1504
    %v1520 = vcombine.low %v1511, %v1518
    %v1522 = vunpack.c.l.s4 1966171168
    %v1523 = vunpack.c.0.s8 %v1522
    %v1524 = vlaneseq
    %v1525 = vshrl.u32 %v1524, 7
    %v1526 = vsub.s32 %v1523, %v1525
    %v1527 = vrot.slane %v1519, %v1526
    %v1529 = vunpack.c.l.s4 1966171168
    %v1530 = vunpack.c.0.s8 %v1529
    %v1531 = vlaneseq
    %v1532 = vshrl.u32 %v1531, 7
    %v1533 = vsub.s32 %v1530, %v1532
    %v1534 = vrot.slane %v1520, %v1533
    %v1535 = vcombine.low %v1527, %v1534
    %v1536 = vcombine.low %v806, %v810
    %v1537 = vcombine.low %v814, %v818
    %v1538 = vcombine.low %v822, %v826
    %v1539 = vcombine.low %v830, %v834
    %v1541 = vunpack.c.l.s4 1966171168
    %v1542 = vunpack.c.0.s8 %v1541
    %v1543 = vlaneseq
    %v1544 = vshrl.u32 %v1543, 7
    %v1545 = vsub.s32 %v1542, %v1544
    %v1546 = vrot.slane %v1536, %v1545
    %v1548 = vunpack.c.l.s4 1966171168
    %v1549 = vunpack.c.0.s8 %v1548
    %v1550 = vlaneseq
    %v1551 = vshrl.u32 %v1550, 7
    %v1552 = vsub.s32 %v1549, %v1551
    %v1553 = vrot.slane %v1537, %v1552
    %v1555 = vunpack.c.l.s4 1966171168
    %v1556 = vunpack.c.0.s8 %v1555
    %v1557 = vlaneseq
    %v1558 = vshrl.u32 %v1557, 7
    %v1559 = vsub.s32 %v1556, %v1558
    %v1560 = vrot.slane %v1538, %v1559
    %v1562 = vunpack.c.l.s4 1966171168
    %v1563 = vunpack.c.0.s8 %v1562
    %v1564 = vlaneseq
    %v1565 = vshrl.u32 %v1564, 7
    %v1566 = vsub.s32 %v1563, %v1565
    %v1567 = vrot.slane %v1539, %v1566
    %v1568 = vcombine.low %v1546, %v1553
    %v1569 = vcombine.low %v1560, %v1567
    %v1571 = vunpack.c.l.s4 1966171168
    %v1572 = vunpack.c.0.s8 %v1571
    %v1573 = vlaneseq
    %v1574 = vshrl.u32 %v1573, 7
    %v1575 = vsub.s32 %v1572, %v1574
    %v1576 = vrot.slane %v1568, %v1575
    %v1578 = vunpack.c.l.s4 1966171168
    %v1579 = vunpack.c.0.s8 %v1578
    %v1580 = vlaneseq
    %v1581 = vshrl.u32 %v1580, 7
    %v1582 = vsub.s32 %v1579, %v1581
    %v1583 = vrot.slane %v1569, %v1582
    %v1584 = vcombine.low %v1576, %v1583
    %v1585 = vcombine.low %v838, %v842
    %v1586 = vcombine.low %v846, %v850
    %v1587 = vcombine.low %v854, %v858
    %v1588 = vcombine.low %v862, %v866
    %v1590 = vunpack.c.l.s4 1966171168
    %v1591 = vunpack.c.0.s8 %v1590
    %v1592 = vlaneseq
    %v1593 = vshrl.u32 %v1592, 7
    %v1594 = vsub.s32 %v1591, %v1593
    %v1595 = vrot.slane %v1585, %v1594
    %v1597 = vunpack.c.l.s4 1966171168
    %v1598 = vunpack.c.0.s8 %v1597
    %v1599 = vlaneseq
    %v1600 = vshrl.u32 %v1599, 7
    %v1601 = vsub.s32 %v1598, %v1600
    %v1602 = vrot.slane %v1586, %v1601
    %v1604 = vunpack.c.l.s4 1966171168
    %v1605 = vunpack.c.0.s8 %v1604
    %v1606 = vlaneseq
    %v1607 = vshrl.u32 %v1606, 7
    %v1608 = vsub.s32 %v1605, %v1607
    %v1609 = vrot.slane %v1587, %v1608
    %v1611 = vunpack.c.l.s4 1966171168
    %v1612 = vunpack.c.0.s8 %v1611
    %v1613 = vlaneseq
    %v1614 = vshrl.u32 %v1613, 7
    %v1615 = vsub.s32 %v1612, %v1614
    %v1616 = vrot.slane %v1588, %v1615
    %v1617 = vcombine.low %v1595, %v1602
    %v1618 = vcombine.low %v1609, %v1616
    %v1620 = vunpack.c.l.s4 1966171168
    %v1621 = vunpack.c.0.s8 %v1620
    %v1622 = vlaneseq
    %v1623 = vshrl.u32 %v1622, 7
    %v1624 = vsub.s32 %v1621, %v1623
    %v1625 = vrot.slane %v1617, %v1624
    %v1627 = vunpack.c.l.s4 1966171168
    %v1628 = vunpack.c.0.s8 %v1627
    %v1629 = vlaneseq
    %v1630 = vshrl.u32 %v1629, 7
    %v1631 = vsub.s32 %v1628, %v1630
    %v1632 = vrot.slane %v1618, %v1631
    %v1633 = vcombine.low %v1625, %v1632
    %v1634 = vcombine.low %v870, %v874
    %v1635 = vcombine.low %v878, %v882
    %v1636 = vcombine.low %v886, %v890
    %v1637 = vcombine.low %v894, %v898
    %v1639 = vunpack.c.l.s4 1966171168
    %v1640 = vunpack.c.0.s8 %v1639
    %v1641 = vlaneseq
    %v1642 = vshrl.u32 %v1641, 7
    %v1643 = vsub.s32 %v1640, %v1642
    %v1644 = vrot.slane %v1634, %v1643
    %v1646 = vunpack.c.l.s4 1966171168
    %v1647 = vunpack.c.0.s8 %v1646
    %v1648 = vlaneseq
    %v1649 = vshrl.u32 %v1648, 7
    %v1650 = vsub.s32 %v1647, %v1649
    %v1651 = vrot.slane %v1635, %v1650
    %v1653 = vunpack.c.l.s4 1966171168
    %v1654 = vunpack.c.0.s8 %v1653
    %v1655 = vlaneseq
    %v1656 = vshrl.u32 %v1655, 7
    %v1657 = vsub.s32 %v1654, %v1656
    %v1658 = vrot.slane %v1636, %v1657
    %v1660 = vunpack.c.l.s4 1966171168
    %v1661 = vunpack.c.0.s8 %v1660
    %v1662 = vlaneseq
    %v1663 = vshrl.u32 %v1662, 7
    %v1664 = vsub.s32 %v1661, %v1663
    %v1665 = vrot.slane %v1637, %v1664
    %v1666 = vcombine.low %v1644, %v1651
    %v1667 = vcombine.low %v1658, %v1665
    %v1669 = vunpack.c.l.s4 1966171168
    %v1670 = vunpack.c.0.s8 %v1669
    %v1671 = vlaneseq
    %v1672 = vshrl.u32 %v1671, 7
    %v1673 = vsub.s32 %v1670, %v1672
    %v1674 = vrot.slane %v1666, %v1673
    %v1676 = vunpack.c.l.s4 1966171168
    %v1677 = vunpack.c.0.s8 %v1676
    %v1678 = vlaneseq
    %v1679 = vshrl.u32 %v1678, 7
    %v1680 = vsub.s32 %v1677, %v1679
    %v1681 = vrot.slane %v1667, %v1680
    %v1682 = vcombine.low %v1674, %v1681
    %1683 = vset.pattern.permute.xlu0 0
    %1684 = vperm.xlu0 %1683, %v947
    %v1685 = vpop.permute.xlu0 %1684
    %1686 = vset.pattern.permute.xlu0 0
    %1687 = vperm.xlu0 %1686, %v996
    %v1688 = vpop.permute.xlu0 %1687
    %1689 = vset.pattern.permute.xlu0 0
    %1690 = vperm.xlu0 %1689, %v1045
    %v1691 = vpop.permute.xlu0 %1690
    %1692 = vset.pattern.permute.xlu0 0
    %1693 = vperm.xlu0 %1692, %v1094
    %v1694 = vpop.permute.xlu0 %1693
    %1695 = vset.pattern.permute.xlu0 0
    %1696 = vperm.xlu0 %1695, %v1143
    %v1697 = vpop.permute.xlu0 %1696
    %1698 = vset.pattern.permute.xlu0 0
    %1699 = vperm.xlu0 %1698, %v1192
    %v1700 = vpop.permute.xlu0 %1699
    %1701 = vset.pattern.permute.xlu0 0
    %1702 = vperm.xlu0 %1701, %v1241
    %v1703 = vpop.permute.xlu0 %1702
    %1704 = vset.pattern.permute.xlu0 0
    %1705 = vperm.xlu0 %1704, %v1290
    %v1706 = vpop.permute.xlu0 %1705
    %1707 = vset.pattern.permute.xlu0 0
    %1708 = vperm.xlu0 %1707, %v1339
    %v1709 = vpop.permute.xlu0 %1708
    %1710 = vset.pattern.permute.xlu0 0
    %1711 = vperm.xlu0 %1710, %v1388
    %v1712 = vpop.permute.xlu0 %1711
    %1713 = vset.pattern.permute.xlu0 0
    %1714 = vperm.xlu0 %1713, %v1437
    %v1715 = vpop.permute.xlu0 %1714
    %1716 = vset.pattern.permute.xlu0 0
    %1717 = vperm.xlu0 %1716, %v1486
    %v1718 = vpop.permute.xlu0 %1717
    %1719 = vset.pattern.permute.xlu0 0
    %1720 = vperm.xlu0 %1719, %v1535
    %v1721 = vpop.permute.xlu0 %1720
    %1722 = vset.pattern.permute.xlu0 0
    %1723 = vperm.xlu0 %1722, %v1584
    %v1724 = vpop.permute.xlu0 %1723
    %1725 = vset.pattern.permute.xlu0 0
    %1726 = vperm.xlu0 %1725, %v1633
    %v1727 = vpop.permute.xlu0 %1726
    %1728 = vset.pattern.permute.xlu0 0
    %1729 = vperm.xlu0 %1728, %v1682
    %v1730 = vpop.permute.xlu0 %1729
    %v1731 = vlaneseq
    %v1732 = vand.u32 %v1731, 127
    %v1733 = vlaneseq
    %v1734 = vshrl.u32 %v1733, 7
    %v1735 = vsub.s32 %v1732, %v1734
    %v1736 = vrot.slane %v1685, %v1735
    %v1737 = vadd.s32 %v1732, 4294967288
    %v1738 = vlaneseq
    %v1739 = vshrl.u32 %v1738, 7
    %v1740 = vsub.s32 %v1737, %v1739
    %v1741 = vrot.slane %v1688, %v1740
    %vm1742 = vcmask 130112
    %v1743 = vsel %vm1742, %v1741, %v1736
    %v1744 = vadd.s32 %v1732, 4294967280
    %v1745 = vlaneseq
    %v1746 = vshrl.u32 %v1745, 7
    %v1747 = vsub.s32 %v1744, %v1746
    %v1748 = vrot.slane %v1691, %v1747
    %vm1749 = vcmask 195712
    %v1750 = vsel %vm1749, %v1748, %v1743
    %v1751 = vadd.s32 %v1732, 4294967272
    %v1752 = vlaneseq
    %v1753 = vshrl.u32 %v1752, 7
    %v1754 = vsub.s32 %v1751, %v1753
    %v1755 = vrot.slane %v1694, %v1754
    %vm1756 = vcmask 261312
    %v1757 = vsel %vm1756, %v1755, %v1750
    %v1758 = vadd.s32 %v1732, 4294967264
    %v1759 = vlaneseq
    %v1760 = vshrl.u32 %v1759, 7
    %v1761 = vsub.s32 %v1758, %v1760
    %v1762 = vrot.slane %v1697, %v1761
    %vm1763 = vcmask 326912
    %v1764 = vsel %vm1763, %v1762, %v1757
    %v1765 = vadd.s32 %v1732, 4294967256
    %v1766 = vlaneseq
    %v1767 = vshrl.u32 %v1766, 7
    %v1768 = vsub.s32 %v1765, %v1767
    %v1769 = vrot.slane %v1700, %v1768
    %vm1770 = vcmask 392512
    %v1771 = vsel %vm1770, %v1769, %v1764
    %v1772 = vadd.s32 %v1732, 4294967248
    %v1773 = vlaneseq
    %v1774 = vshrl.u32 %v1773, 7
    %v1775 = vsub.s32 %v1772, %v1774
    %v1776 = vrot.slane %v1703, %v1775
    %vm1777 = vcmask 458112
    %v1778 = vsel %vm1777, %v1776, %v1771
    %v1779 = vadd.s32 %v1732, 4294967240
    %v1780 = vlaneseq
    %v1781 = vshrl.u32 %v1780, 7
    %v1782 = vsub.s32 %v1779, %v1781
    %v1783 = vrot.slane %v1706, %v1782
    %vm1784 = vcmask 523712
    %v1785 = vsel %vm1784, %v1783, %v1778
    %v1786 = vadd.s32 %v1732, 4294967232
    %v1787 = vlaneseq
    %v1788 = vshrl.u32 %v1787, 7
    %v1789 = vsub.s32 %v1786, %v1788
    %v1790 = vrot.slane %v1709, %v1789
    %vm1791 = vcmask 589312
    %v1792 = vsel %vm1791, %v1790, %v1785
    %v1793 = vadd.s32 %v1732, 4294967224
    %v1794 = vlaneseq
    %v1795 = vshrl.u32 %v1794, 7
    %v1796 = vsub.s32 %v1793, %v1795
    %v1797 = vrot.slane %v1712, %v1796
    %vm1798 = vcmask 654912
    %v1799 = vsel %vm1798, %v1797, %v1792
    %v1800 = vadd.s32 %v1732, 4294967216
    %v1801 = vlaneseq
    %v1802 = vshrl.u32 %v1801, 7
    %v1803 = vsub.s32 %v1800, %v1802
    %v1804 = vrot.slane %v1715, %v1803
    %vm1805 = vcmask 720512
    %v1806 = vsel %vm1805, %v1804, %v1799
    %v1807 = vadd.s32 %v1732, 4294967208
    %v1808 = vlaneseq
    %v1809 = vshrl.u32 %v1808, 7
    %v1810 = vsub.s32 %v1807, %v1809
    %v1811 = vrot.slane %v1718, %v1810
    %vm1812 = vcmask 786112
    %v1813 = vsel %vm1812, %v1811, %v1806
    %v1814 = vadd.s32 %v1732, 4294967200
    %v1815 = vlaneseq
    %v1816 = vshrl.u32 %v1815, 7
    %v1817 = vsub.s32 %v1814, %v1816
    %v1818 = vrot.slane %v1721, %v1817
    %vm1819 = vcmask 851712
    %v1820 = vsel %vm1819, %v1818, %v1813
    %v1821 = vadd.s32 %v1732, 4294967192
    %v1822 = vlaneseq
    %v1823 = vshrl.u32 %v1822, 7
    %v1824 = vsub.s32 %v1821, %v1823
    %v1825 = vrot.slane %v1724, %v1824
    %vm1826 = vcmask 917312
    %v1827 = vsel %vm1826, %v1825, %v1820
    %v1828 = vadd.s32 %v1732, 4294967184
    %v1829 = vlaneseq
    %v1830 = vshrl.u32 %v1829, 7
    %v1831 = vsub.s32 %v1828, %v1830
    %v1832 = vrot.slane %v1727, %v1831
    %vm1833 = vcmask 982912
    %v1834 = vsel %vm1833, %v1832, %v1827
    %v1835 = vadd.s32 %v1732, 4294967176
    %v1836 = vlaneseq
    %v1837 = vshrl.u32 %v1836, 7
    %v1838 = vsub.s32 %v1835, %v1837
    %v1839 = vrot.slane %v1730, %v1838
    %vm1840 = vcmask 1048512
    %v1841 = vsel %vm1840, %v1839, %v1834
    %v1843 = vunpack.c.l.s4 1966171168
    %v1844 = vunpack.c.0.s8 %v1843
    %v1845 = vlaneseq
    %v1846 = vshrl.u32 %v1845, 7
    %v1847 = vsub.s32 %v1844, %v1846
    %v1848 = vrot.slane %v1841, %v1847
    %v1850 = vunpack.c.l.s4 1966171168
    %v1851 = vunpack.c.0.s8 %v1850
    %v1852 = vlaneseq
    %v1853 = vshrl.u32 %v1852, 7
    %v1854 = vsub.s32 %v1851, %v1853
    %v1855 = vrot.slane %v1848, %v1854
    %v1857 = vmul.f32 %v370, %v1855
    %v1858 = vsub.f32 1.0, %v370
    %v1875 = vlaneseq
    %v1876 = vshrl.u32 %v1875, 7
    %v1877 = vsub.s32 0, %v1876
    %v1878 = vrot.slane %v354, %v1877
    %v1879 = vlaneseq
    %v1880 = vshrl.u32 %v1879, 7
    %v1881 = vsub.s32 1, %v1880
    %v1882 = vrot.slane %v354, %v1881
    %v1883 = vlaneseq
    %v1884 = vshrl.u32 %v1883, 7
    %v1885 = vsub.s32 2, %v1884
    %v1886 = vrot.slane %v354, %v1885
    %v1887 = vlaneseq
    %v1888 = vshrl.u32 %v1887, 7
    %v1889 = vsub.s32 3, %v1888
    %v1890 = vrot.slane %v354, %v1889
    %v1891 = vlaneseq
    %v1892 = vshrl.u32 %v1891, 7
    %v1893 = vsub.s32 4, %v1892
    %v1894 = vrot.slane %v354, %v1893
    %v1895 = vlaneseq
    %v1896 = vshrl.u32 %v1895, 7
    %v1897 = vsub.s32 5, %v1896
    %v1898 = vrot.slane %v354, %v1897
    %v1899 = vlaneseq
    %v1900 = vshrl.u32 %v1899, 7
    %v1901 = vsub.s32 6, %v1900
    %v1902 = vrot.slane %v354, %v1901
    %v1903 = vlaneseq
    %v1904 = vshrl.u32 %v1903, 7
    %v1905 = vsub.s32 7, %v1904
    %v1906 = vrot.slane %v354, %v1905
    %v1907 = vlaneseq
    %v1908 = vshrl.u32 %v1907, 7
    %v1909 = vsub.s32 0, %v1908
    %v1910 = vrot.slane %v355, %v1909
    %v1911 = vlaneseq
    %v1912 = vshrl.u32 %v1911, 7
    %v1913 = vsub.s32 1, %v1912
    %v1914 = vrot.slane %v355, %v1913
    %v1915 = vlaneseq
    %v1916 = vshrl.u32 %v1915, 7
    %v1917 = vsub.s32 2, %v1916
    %v1918 = vrot.slane %v355, %v1917
    %v1919 = vlaneseq
    %v1920 = vshrl.u32 %v1919, 7
    %v1921 = vsub.s32 3, %v1920
    %v1922 = vrot.slane %v355, %v1921
    %v1923 = vlaneseq
    %v1924 = vshrl.u32 %v1923, 7
    %v1925 = vsub.s32 4, %v1924
    %v1926 = vrot.slane %v355, %v1925
    %v1927 = vlaneseq
    %v1928 = vshrl.u32 %v1927, 7
    %v1929 = vsub.s32 5, %v1928
    %v1930 = vrot.slane %v355, %v1929
    %v1931 = vlaneseq
    %v1932 = vshrl.u32 %v1931, 7
    %v1933 = vsub.s32 6, %v1932
    %v1934 = vrot.slane %v355, %v1933
    %v1935 = vlaneseq
    %v1936 = vshrl.u32 %v1935, 7
    %v1937 = vsub.s32 7, %v1936
    %v1938 = vrot.slane %v355, %v1937
    %v1939 = vlaneseq
    %v1940 = vshrl.u32 %v1939, 7
    %v1941 = vsub.s32 0, %v1940
    %v1942 = vrot.slane %v356, %v1941
    %v1943 = vlaneseq
    %v1944 = vshrl.u32 %v1943, 7
    %v1945 = vsub.s32 1, %v1944
    %v1946 = vrot.slane %v356, %v1945
    %v1947 = vlaneseq
    %v1948 = vshrl.u32 %v1947, 7
    %v1949 = vsub.s32 2, %v1948
    %v1950 = vrot.slane %v356, %v1949
    %v1951 = vlaneseq
    %v1952 = vshrl.u32 %v1951, 7
    %v1953 = vsub.s32 3, %v1952
    %v1954 = vrot.slane %v356, %v1953
    %v1955 = vlaneseq
    %v1956 = vshrl.u32 %v1955, 7
    %v1957 = vsub.s32 4, %v1956
    %v1958 = vrot.slane %v356, %v1957
    %v1959 = vlaneseq
    %v1960 = vshrl.u32 %v1959, 7
    %v1961 = vsub.s32 5, %v1960
    %v1962 = vrot.slane %v356, %v1961
    %v1963 = vlaneseq
    %v1964 = vshrl.u32 %v1963, 7
    %v1965 = vsub.s32 6, %v1964
    %v1966 = vrot.slane %v356, %v1965
    %v1967 = vlaneseq
    %v1968 = vshrl.u32 %v1967, 7
    %v1969 = vsub.s32 7, %v1968
    %v1970 = vrot.slane %v356, %v1969
    %v1971 = vlaneseq
    %v1972 = vshrl.u32 %v1971, 7
    %v1973 = vsub.s32 0, %v1972
    %v1974 = vrot.slane %v357, %v1973
    %v1975 = vlaneseq
    %v1976 = vshrl.u32 %v1975, 7
    %v1977 = vsub.s32 1, %v1976
    %v1978 = vrot.slane %v357, %v1977
    %v1979 = vlaneseq
    %v1980 = vshrl.u32 %v1979, 7
    %v1981 = vsub.s32 2, %v1980
    %v1982 = vrot.slane %v357, %v1981
    %v1983 = vlaneseq
    %v1984 = vshrl.u32 %v1983, 7
    %v1985 = vsub.s32 3, %v1984
    %v1986 = vrot.slane %v357, %v1985
    %v1987 = vlaneseq
    %v1988 = vshrl.u32 %v1987, 7
    %v1989 = vsub.s32 4, %v1988
    %v1990 = vrot.slane %v357, %v1989
    %v1991 = vlaneseq
    %v1992 = vshrl.u32 %v1991, 7
    %v1993 = vsub.s32 5, %v1992
    %v1994 = vrot.slane %v357, %v1993
    %v1995 = vlaneseq
    %v1996 = vshrl.u32 %v1995, 7
    %v1997 = vsub.s32 6, %v1996
    %v1998 = vrot.slane %v357, %v1997
    %v1999 = vlaneseq
    %v2000 = vshrl.u32 %v1999, 7
    %v2001 = vsub.s32 7, %v2000
    %v2002 = vrot.slane %v357, %v2001
    %v2003 = vlaneseq
    %v2004 = vshrl.u32 %v2003, 7
    %v2005 = vsub.s32 0, %v2004
    %v2006 = vrot.slane %v358, %v2005
    %v2007 = vlaneseq
    %v2008 = vshrl.u32 %v2007, 7
    %v2009 = vsub.s32 1, %v2008
    %v2010 = vrot.slane %v358, %v2009
    %v2011 = vlaneseq
    %v2012 = vshrl.u32 %v2011, 7
    %v2013 = vsub.s32 2, %v2012
    %v2014 = vrot.slane %v358, %v2013
    %v2015 = vlaneseq
    %v2016 = vshrl.u32 %v2015, 7
    %v2017 = vsub.s32 3, %v2016
    %v2018 = vrot.slane %v358, %v2017
    %v2019 = vlaneseq
    %v2020 = vshrl.u32 %v2019, 7
    %v2021 = vsub.s32 4, %v2020
    %v2022 = vrot.slane %v358, %v2021
    %v2023 = vlaneseq
    %v2024 = vshrl.u32 %v2023, 7
    %v2025 = vsub.s32 5, %v2024
    %v2026 = vrot.slane %v358, %v2025
    %v2027 = vlaneseq
    %v2028 = vshrl.u32 %v2027, 7
    %v2029 = vsub.s32 6, %v2028
    %v2030 = vrot.slane %v358, %v2029
    %v2031 = vlaneseq
    %v2032 = vshrl.u32 %v2031, 7
    %v2033 = vsub.s32 7, %v2032
    %v2034 = vrot.slane %v358, %v2033
    %v2035 = vlaneseq
    %v2036 = vshrl.u32 %v2035, 7
    %v2037 = vsub.s32 0, %v2036
    %v2038 = vrot.slane %v359, %v2037
    %v2039 = vlaneseq
    %v2040 = vshrl.u32 %v2039, 7
    %v2041 = vsub.s32 1, %v2040
    %v2042 = vrot.slane %v359, %v2041
    %v2043 = vlaneseq
    %v2044 = vshrl.u32 %v2043, 7
    %v2045 = vsub.s32 2, %v2044
    %v2046 = vrot.slane %v359, %v2045
    %v2047 = vlaneseq
    %v2048 = vshrl.u32 %v2047, 7
    %v2049 = vsub.s32 3, %v2048
    %v2050 = vrot.slane %v359, %v2049
    %v2051 = vlaneseq
    %v2052 = vshrl.u32 %v2051, 7
    %v2053 = vsub.s32 4, %v2052
    %v2054 = vrot.slane %v359, %v2053
    %v2055 = vlaneseq
    %v2056 = vshrl.u32 %v2055, 7
    %v2057 = vsub.s32 5, %v2056
    %v2058 = vrot.slane %v359, %v2057
    %v2059 = vlaneseq
    %v2060 = vshrl.u32 %v2059, 7
    %v2061 = vsub.s32 6, %v2060
    %v2062 = vrot.slane %v359, %v2061
    %v2063 = vlaneseq
    %v2064 = vshrl.u32 %v2063, 7
    %v2065 = vsub.s32 7, %v2064
    %v2066 = vrot.slane %v359, %v2065
    %v2067 = vlaneseq
    %v2068 = vshrl.u32 %v2067, 7
    %v2069 = vsub.s32 0, %v2068
    %v2070 = vrot.slane %v360, %v2069
    %v2071 = vlaneseq
    %v2072 = vshrl.u32 %v2071, 7
    %v2073 = vsub.s32 1, %v2072
    %v2074 = vrot.slane %v360, %v2073
    %v2075 = vlaneseq
    %v2076 = vshrl.u32 %v2075, 7
    %v2077 = vsub.s32 2, %v2076
    %v2078 = vrot.slane %v360, %v2077
    %v2079 = vlaneseq
    %v2080 = vshrl.u32 %v2079, 7
    %v2081 = vsub.s32 3, %v2080
    %v2082 = vrot.slane %v360, %v2081
    %v2083 = vlaneseq
    %v2084 = vshrl.u32 %v2083, 7
    %v2085 = vsub.s32 4, %v2084
    %v2086 = vrot.slane %v360, %v2085
    %v2087 = vlaneseq
    %v2088 = vshrl.u32 %v2087, 7
    %v2089 = vsub.s32 5, %v2088
    %v2090 = vrot.slane %v360, %v2089
    %v2091 = vlaneseq
    %v2092 = vshrl.u32 %v2091, 7
    %v2093 = vsub.s32 6, %v2092
    %v2094 = vrot.slane %v360, %v2093
    %v2095 = vlaneseq
    %v2096 = vshrl.u32 %v2095, 7
    %v2097 = vsub.s32 7, %v2096
    %v2098 = vrot.slane %v360, %v2097
    %v2099 = vlaneseq
    %v2100 = vshrl.u32 %v2099, 7
    %v2101 = vsub.s32 0, %v2100
    %v2102 = vrot.slane %v361, %v2101
    %v2103 = vlaneseq
    %v2104 = vshrl.u32 %v2103, 7
    %v2105 = vsub.s32 1, %v2104
    %v2106 = vrot.slane %v361, %v2105
    %v2107 = vlaneseq
    %v2108 = vshrl.u32 %v2107, 7
    %v2109 = vsub.s32 2, %v2108
    %v2110 = vrot.slane %v361, %v2109
    %v2111 = vlaneseq
    %v2112 = vshrl.u32 %v2111, 7
    %v2113 = vsub.s32 3, %v2112
    %v2114 = vrot.slane %v361, %v2113
    %v2115 = vlaneseq
    %v2116 = vshrl.u32 %v2115, 7
    %v2117 = vsub.s32 4, %v2116
    %v2118 = vrot.slane %v361, %v2117
    %v2119 = vlaneseq
    %v2120 = vshrl.u32 %v2119, 7
    %v2121 = vsub.s32 5, %v2120
    %v2122 = vrot.slane %v361, %v2121
    %v2123 = vlaneseq
    %v2124 = vshrl.u32 %v2123, 7
    %v2125 = vsub.s32 6, %v2124
    %v2126 = vrot.slane %v361, %v2125
    %v2127 = vlaneseq
    %v2128 = vshrl.u32 %v2127, 7
    %v2129 = vsub.s32 7, %v2128
    %v2130 = vrot.slane %v361, %v2129
    %v2131 = vlaneseq
    %v2132 = vshrl.u32 %v2131, 7
    %v2133 = vsub.s32 0, %v2132
    %v2134 = vrot.slane %v362, %v2133
    %v2135 = vlaneseq
    %v2136 = vshrl.u32 %v2135, 7
    %v2137 = vsub.s32 1, %v2136
    %v2138 = vrot.slane %v362, %v2137
    %v2139 = vlaneseq
    %v2140 = vshrl.u32 %v2139, 7
    %v2141 = vsub.s32 2, %v2140
    %v2142 = vrot.slane %v362, %v2141
    %v2143 = vlaneseq
    %v2144 = vshrl.u32 %v2143, 7
    %v2145 = vsub.s32 3, %v2144
    %v2146 = vrot.slane %v362, %v2145
    %v2147 = vlaneseq
    %v2148 = vshrl.u32 %v2147, 7
    %v2149 = vsub.s32 4, %v2148
    %v2150 = vrot.slane %v362, %v2149
    %v2151 = vlaneseq
    %v2152 = vshrl.u32 %v2151, 7
    %v2153 = vsub.s32 5, %v2152
    %v2154 = vrot.slane %v362, %v2153
    %v2155 = vlaneseq
    %v2156 = vshrl.u32 %v2155, 7
    %v2157 = vsub.s32 6, %v2156
    %v2158 = vrot.slane %v362, %v2157
    %v2159 = vlaneseq
    %v2160 = vshrl.u32 %v2159, 7
    %v2161 = vsub.s32 7, %v2160
    %v2162 = vrot.slane %v362, %v2161
    %v2163 = vlaneseq
    %v2164 = vshrl.u32 %v2163, 7
    %v2165 = vsub.s32 0, %v2164
    %v2166 = vrot.slane %v363, %v2165
    %v2167 = vlaneseq
    %v2168 = vshrl.u32 %v2167, 7
    %v2169 = vsub.s32 1, %v2168
    %v2170 = vrot.slane %v363, %v2169
    %v2171 = vlaneseq
    %v2172 = vshrl.u32 %v2171, 7
    %v2173 = vsub.s32 2, %v2172
    %v2174 = vrot.slane %v363, %v2173
    %v2175 = vlaneseq
    %v2176 = vshrl.u32 %v2175, 7
    %v2177 = vsub.s32 3, %v2176
    %v2178 = vrot.slane %v363, %v2177
    %v2179 = vlaneseq
    %v2180 = vshrl.u32 %v2179, 7
    %v2181 = vsub.s32 4, %v2180
    %v2182 = vrot.slane %v363, %v2181
    %v2183 = vlaneseq
    %v2184 = vshrl.u32 %v2183, 7
    %v2185 = vsub.s32 5, %v2184
    %v2186 = vrot.slane %v363, %v2185
    %v2187 = vlaneseq
    %v2188 = vshrl.u32 %v2187, 7
    %v2189 = vsub.s32 6, %v2188
    %v2190 = vrot.slane %v363, %v2189
    %v2191 = vlaneseq
    %v2192 = vshrl.u32 %v2191, 7
    %v2193 = vsub.s32 7, %v2192
    %v2194 = vrot.slane %v363, %v2193
    %v2195 = vlaneseq
    %v2196 = vshrl.u32 %v2195, 7
    %v2197 = vsub.s32 0, %v2196
    %v2198 = vrot.slane %v364, %v2197
    %v2199 = vlaneseq
    %v2200 = vshrl.u32 %v2199, 7
    %v2201 = vsub.s32 1, %v2200
    %v2202 = vrot.slane %v364, %v2201
    %v2203 = vlaneseq
    %v2204 = vshrl.u32 %v2203, 7
    %v2205 = vsub.s32 2, %v2204
    %v2206 = vrot.slane %v364, %v2205
    %v2207 = vlaneseq
    %v2208 = vshrl.u32 %v2207, 7
    %v2209 = vsub.s32 3, %v2208
    %v2210 = vrot.slane %v364, %v2209
    %v2211 = vlaneseq
    %v2212 = vshrl.u32 %v2211, 7
    %v2213 = vsub.s32 4, %v2212
    %v2214 = vrot.slane %v364, %v2213
    %v2215 = vlaneseq
    %v2216 = vshrl.u32 %v2215, 7
    %v2217 = vsub.s32 5, %v2216
    %v2218 = vrot.slane %v364, %v2217
    %v2219 = vlaneseq
    %v2220 = vshrl.u32 %v2219, 7
    %v2221 = vsub.s32 6, %v2220
    %v2222 = vrot.slane %v364, %v2221
    %v2223 = vlaneseq
    %v2224 = vshrl.u32 %v2223, 7
    %v2225 = vsub.s32 7, %v2224
    %v2226 = vrot.slane %v364, %v2225
    %v2227 = vlaneseq
    %v2228 = vshrl.u32 %v2227, 7
    %v2229 = vsub.s32 0, %v2228
    %v2230 = vrot.slane %v365, %v2229
    %v2231 = vlaneseq
    %v2232 = vshrl.u32 %v2231, 7
    %v2233 = vsub.s32 1, %v2232
    %v2234 = vrot.slane %v365, %v2233
    %v2235 = vlaneseq
    %v2236 = vshrl.u32 %v2235, 7
    %v2237 = vsub.s32 2, %v2236
    %v2238 = vrot.slane %v365, %v2237
    %v2239 = vlaneseq
    %v2240 = vshrl.u32 %v2239, 7
    %v2241 = vsub.s32 3, %v2240
    %v2242 = vrot.slane %v365, %v2241
    %v2243 = vlaneseq
    %v2244 = vshrl.u32 %v2243, 7
    %v2245 = vsub.s32 4, %v2244
    %v2246 = vrot.slane %v365, %v2245
    %v2247 = vlaneseq
    %v2248 = vshrl.u32 %v2247, 7
    %v2249 = vsub.s32 5, %v2248
    %v2250 = vrot.slane %v365, %v2249
    %v2251 = vlaneseq
    %v2252 = vshrl.u32 %v2251, 7
    %v2253 = vsub.s32 6, %v2252
    %v2254 = vrot.slane %v365, %v2253
    %v2255 = vlaneseq
    %v2256 = vshrl.u32 %v2255, 7
    %v2257 = vsub.s32 7, %v2256
    %v2258 = vrot.slane %v365, %v2257
    %v2259 = vlaneseq
    %v2260 = vshrl.u32 %v2259, 7
    %v2261 = vsub.s32 0, %v2260
    %v2262 = vrot.slane %v366, %v2261
    %v2263 = vlaneseq
    %v2264 = vshrl.u32 %v2263, 7
    %v2265 = vsub.s32 1, %v2264
    %v2266 = vrot.slane %v366, %v2265
    %v2267 = vlaneseq
    %v2268 = vshrl.u32 %v2267, 7
    %v2269 = vsub.s32 2, %v2268
    %v2270 = vrot.slane %v366, %v2269
    %v2271 = vlaneseq
    %v2272 = vshrl.u32 %v2271, 7
    %v2273 = vsub.s32 3, %v2272
    %v2274 = vrot.slane %v366, %v2273
    %v2275 = vlaneseq
    %v2276 = vshrl.u32 %v2275, 7
    %v2277 = vsub.s32 4, %v2276
    %v2278 = vrot.slane %v366, %v2277
    %v2279 = vlaneseq
    %v2280 = vshrl.u32 %v2279, 7
    %v2281 = vsub.s32 5, %v2280
    %v2282 = vrot.slane %v366, %v2281
    %v2283 = vlaneseq
    %v2284 = vshrl.u32 %v2283, 7
    %v2285 = vsub.s32 6, %v2284
    %v2286 = vrot.slane %v366, %v2285
    %v2287 = vlaneseq
    %v2288 = vshrl.u32 %v2287, 7
    %v2289 = vsub.s32 7, %v2288
    %v2290 = vrot.slane %v366, %v2289
    %v2291 = vlaneseq
    %v2292 = vshrl.u32 %v2291, 7
    %v2293 = vsub.s32 0, %v2292
    %v2294 = vrot.slane %v367, %v2293
    %v2295 = vlaneseq
    %v2296 = vshrl.u32 %v2295, 7
    %v2297 = vsub.s32 1, %v2296
    %v2298 = vrot.slane %v367, %v2297
    %v2299 = vlaneseq
    %v2300 = vshrl.u32 %v2299, 7
    %v2301 = vsub.s32 2, %v2300
    %v2302 = vrot.slane %v367, %v2301
    %v2303 = vlaneseq
    %v2304 = vshrl.u32 %v2303, 7
    %v2305 = vsub.s32 3, %v2304
    %v2306 = vrot.slane %v367, %v2305
    %v2307 = vlaneseq
    %v2308 = vshrl.u32 %v2307, 7
    %v2309 = vsub.s32 4, %v2308
    %v2310 = vrot.slane %v367, %v2309
    %v2311 = vlaneseq
    %v2312 = vshrl.u32 %v2311, 7
    %v2313 = vsub.s32 5, %v2312
    %v2314 = vrot.slane %v367, %v2313
    %v2315 = vlaneseq
    %v2316 = vshrl.u32 %v2315, 7
    %v2317 = vsub.s32 6, %v2316
    %v2318 = vrot.slane %v367, %v2317
    %v2319 = vlaneseq
    %v2320 = vshrl.u32 %v2319, 7
    %v2321 = vsub.s32 7, %v2320
    %v2322 = vrot.slane %v367, %v2321
    %v2323 = vlaneseq
    %v2324 = vshrl.u32 %v2323, 7
    %v2325 = vsub.s32 0, %v2324
    %v2326 = vrot.slane %v368, %v2325
    %v2327 = vlaneseq
    %v2328 = vshrl.u32 %v2327, 7
    %v2329 = vsub.s32 1, %v2328
    %v2330 = vrot.slane %v368, %v2329
    %v2331 = vlaneseq
    %v2332 = vshrl.u32 %v2331, 7
    %v2333 = vsub.s32 2, %v2332
    %v2334 = vrot.slane %v368, %v2333
    %v2335 = vlaneseq
    %v2336 = vshrl.u32 %v2335, 7
    %v2337 = vsub.s32 3, %v2336
    %v2338 = vrot.slane %v368, %v2337
    %v2339 = vlaneseq
    %v2340 = vshrl.u32 %v2339, 7
    %v2341 = vsub.s32 4, %v2340
    %v2342 = vrot.slane %v368, %v2341
    %v2343 = vlaneseq
    %v2344 = vshrl.u32 %v2343, 7
    %v2345 = vsub.s32 5, %v2344
    %v2346 = vrot.slane %v368, %v2345
    %v2347 = vlaneseq
    %v2348 = vshrl.u32 %v2347, 7
    %v2349 = vsub.s32 6, %v2348
    %v2350 = vrot.slane %v368, %v2349
    %v2351 = vlaneseq
    %v2352 = vshrl.u32 %v2351, 7
    %v2353 = vsub.s32 7, %v2352
    %v2354 = vrot.slane %v368, %v2353
    %v2355 = vlaneseq
    %v2356 = vshrl.u32 %v2355, 7
    %v2357 = vsub.s32 0, %v2356
    %v2358 = vrot.slane %v369, %v2357
    %v2359 = vlaneseq
    %v2360 = vshrl.u32 %v2359, 7
    %v2361 = vsub.s32 1, %v2360
    %v2362 = vrot.slane %v369, %v2361
    %v2363 = vlaneseq
    %v2364 = vshrl.u32 %v2363, 7
    %v2365 = vsub.s32 2, %v2364
    %v2366 = vrot.slane %v369, %v2365
    %v2367 = vlaneseq
    %v2368 = vshrl.u32 %v2367, 7
    %v2369 = vsub.s32 3, %v2368
    %v2370 = vrot.slane %v369, %v2369
    %v2371 = vlaneseq
    %v2372 = vshrl.u32 %v2371, 7
    %v2373 = vsub.s32 4, %v2372
    %v2374 = vrot.slane %v369, %v2373
    %v2375 = vlaneseq
    %v2376 = vshrl.u32 %v2375, 7
    %v2377 = vsub.s32 5, %v2376
    %v2378 = vrot.slane %v369, %v2377
    %v2379 = vlaneseq
    %v2380 = vshrl.u32 %v2379, 7
    %v2381 = vsub.s32 6, %v2380
    %v2382 = vrot.slane %v369, %v2381
    %v2383 = vlaneseq
    %v2384 = vshrl.u32 %v2383, 7
    %v2385 = vsub.s32 7, %v2384
    %v2386 = vrot.slane %v369, %v2385
    %v2387 = vcombine.low %v1878, %v1882
    %v2388 = vcombine.low %v1886, %v1890
    %v2389 = vcombine.low %v1894, %v1898
    %v2390 = vcombine.low %v1902, %v1906
    %v2392 = vunpack.c.l.s4 1966171168
    %v2393 = vunpack.c.0.s8 %v2392
    %v2394 = vlaneseq
    %v2395 = vshrl.u32 %v2394, 7
    %v2396 = vsub.s32 %v2393, %v2395
    %v2397 = vrot.slane %v2387, %v2396
    %v2399 = vunpack.c.l.s4 1966171168
    %v2400 = vunpack.c.0.s8 %v2399
    %v2401 = vlaneseq
    %v2402 = vshrl.u32 %v2401, 7
    %v2403 = vsub.s32 %v2400, %v2402
    %v2404 = vrot.slane %v2388, %v2403
    %v2406 = vunpack.c.l.s4 1966171168
    %v2407 = vunpack.c.0.s8 %v2406
    %v2408 = vlaneseq
    %v2409 = vshrl.u32 %v2408, 7
    %v2410 = vsub.s32 %v2407, %v2409
    %v2411 = vrot.slane %v2389, %v2410
    %v2413 = vunpack.c.l.s4 1966171168
    %v2414 = vunpack.c.0.s8 %v2413
    %v2415 = vlaneseq
    %v2416 = vshrl.u32 %v2415, 7
    %v2417 = vsub.s32 %v2414, %v2416
    %v2418 = vrot.slane %v2390, %v2417
    %v2419 = vcombine.low %v2397, %v2404
    %v2420 = vcombine.low %v2411, %v2418
    %v2422 = vunpack.c.l.s4 1966171168
    %v2423 = vunpack.c.0.s8 %v2422
    %v2424 = vlaneseq
    %v2425 = vshrl.u32 %v2424, 7
    %v2426 = vsub.s32 %v2423, %v2425
    %v2427 = vrot.slane %v2419, %v2426
    %v2429 = vunpack.c.l.s4 1966171168
    %v2430 = vunpack.c.0.s8 %v2429
    %v2431 = vlaneseq
    %v2432 = vshrl.u32 %v2431, 7
    %v2433 = vsub.s32 %v2430, %v2432
    %v2434 = vrot.slane %v2420, %v2433
    %v2435 = vcombine.low %v2427, %v2434
    %v2436 = vcombine.low %v1910, %v1914
    %v2437 = vcombine.low %v1918, %v1922
    %v2438 = vcombine.low %v1926, %v1930
    %v2439 = vcombine.low %v1934, %v1938
    %v2441 = vunpack.c.l.s4 1966171168
    %v2442 = vunpack.c.0.s8 %v2441
    %v2443 = vlaneseq
    %v2444 = vshrl.u32 %v2443, 7
    %v2445 = vsub.s32 %v2442, %v2444
    %v2446 = vrot.slane %v2436, %v2445
    %v2448 = vunpack.c.l.s4 1966171168
    %v2449 = vunpack.c.0.s8 %v2448
    %v2450 = vlaneseq
    %v2451 = vshrl.u32 %v2450, 7
    %v2452 = vsub.s32 %v2449, %v2451
    %v2453 = vrot.slane %v2437, %v2452
    %v2455 = vunpack.c.l.s4 1966171168
    %v2456 = vunpack.c.0.s8 %v2455
    %v2457 = vlaneseq
    %v2458 = vshrl.u32 %v2457, 7
    %v2459 = vsub.s32 %v2456, %v2458
    %v2460 = vrot.slane %v2438, %v2459
    %v2462 = vunpack.c.l.s4 1966171168
    %v2463 = vunpack.c.0.s8 %v2462
    %v2464 = vlaneseq
    %v2465 = vshrl.u32 %v2464, 7
    %v2466 = vsub.s32 %v2463, %v2465
    %v2467 = vrot.slane %v2439, %v2466
    %v2468 = vcombine.low %v2446, %v2453
    %v2469 = vcombine.low %v2460, %v2467
    %v2471 = vunpack.c.l.s4 1966171168
    %v2472 = vunpack.c.0.s8 %v2471
    %v2473 = vlaneseq
    %v2474 = vshrl.u32 %v2473, 7
    %v2475 = vsub.s32 %v2472, %v2474
    %v2476 = vrot.slane %v2468, %v2475
    %v2478 = vunpack.c.l.s4 1966171168
    %v2479 = vunpack.c.0.s8 %v2478
    %v2480 = vlaneseq
    %v2481 = vshrl.u32 %v2480, 7
    %v2482 = vsub.s32 %v2479, %v2481
    %v2483 = vrot.slane %v2469, %v2482
    %v2484 = vcombine.low %v2476, %v2483
    %v2485 = vcombine.low %v1942, %v1946
    %v2486 = vcombine.low %v1950, %v1954
    %v2487 = vcombine.low %v1958, %v1962
    %v2488 = vcombine.low %v1966, %v1970
    %v2490 = vunpack.c.l.s4 1966171168
    %v2491 = vunpack.c.0.s8 %v2490
    %v2492 = vlaneseq
    %v2493 = vshrl.u32 %v2492, 7
    %v2494 = vsub.s32 %v2491, %v2493
    %v2495 = vrot.slane %v2485, %v2494
    %v2497 = vunpack.c.l.s4 1966171168
    %v2498 = vunpack.c.0.s8 %v2497
    %v2499 = vlaneseq
    %v2500 = vshrl.u32 %v2499, 7
    %v2501 = vsub.s32 %v2498, %v2500
    %v2502 = vrot.slane %v2486, %v2501
    %v2504 = vunpack.c.l.s4 1966171168
    %v2505 = vunpack.c.0.s8 %v2504
    %v2506 = vlaneseq
    %v2507 = vshrl.u32 %v2506, 7
    %v2508 = vsub.s32 %v2505, %v2507
    %v2509 = vrot.slane %v2487, %v2508
    %v2511 = vunpack.c.l.s4 1966171168
    %v2512 = vunpack.c.0.s8 %v2511
    %v2513 = vlaneseq
    %v2514 = vshrl.u32 %v2513, 7
    %v2515 = vsub.s32 %v2512, %v2514
    %v2516 = vrot.slane %v2488, %v2515
    %v2517 = vcombine.low %v2495, %v2502
    %v2518 = vcombine.low %v2509, %v2516
    %v2520 = vunpack.c.l.s4 1966171168
    %v2521 = vunpack.c.0.s8 %v2520
    %v2522 = vlaneseq
    %v2523 = vshrl.u32 %v2522, 7
    %v2524 = vsub.s32 %v2521, %v2523
    %v2525 = vrot.slane %v2517, %v2524
    %v2527 = vunpack.c.l.s4 1966171168
    %v2528 = vunpack.c.0.s8 %v2527
    %v2529 = vlaneseq
    %v2530 = vshrl.u32 %v2529, 7
    %v2531 = vsub.s32 %v2528, %v2530
    %v2532 = vrot.slane %v2518, %v2531
    %v2533 = vcombine.low %v2525, %v2532
    %v2534 = vcombine.low %v1974, %v1978
    %v2535 = vcombine.low %v1982, %v1986
    %v2536 = vcombine.low %v1990, %v1994
    %v2537 = vcombine.low %v1998, %v2002
    %v2539 = vunpack.c.l.s4 1966171168
    %v2540 = vunpack.c.0.s8 %v2539
    %v2541 = vlaneseq
    %v2542 = vshrl.u32 %v2541, 7
    %v2543 = vsub.s32 %v2540, %v2542
    %v2544 = vrot.slane %v2534, %v2543
    %v2546 = vunpack.c.l.s4 1966171168
    %v2547 = vunpack.c.0.s8 %v2546
    %v2548 = vlaneseq
    %v2549 = vshrl.u32 %v2548, 7
    %v2550 = vsub.s32 %v2547, %v2549
    %v2551 = vrot.slane %v2535, %v2550
    %v2553 = vunpack.c.l.s4 1966171168
    %v2554 = vunpack.c.0.s8 %v2553
    %v2555 = vlaneseq
    %v2556 = vshrl.u32 %v2555, 7
    %v2557 = vsub.s32 %v2554, %v2556
    %v2558 = vrot.slane %v2536, %v2557
    %v2560 = vunpack.c.l.s4 1966171168
    %v2561 = vunpack.c.0.s8 %v2560
    %v2562 = vlaneseq
    %v2563 = vshrl.u32 %v2562, 7
    %v2564 = vsub.s32 %v2561, %v2563
    %v2565 = vrot.slane %v2537, %v2564
    %v2566 = vcombine.low %v2544, %v2551
    %v2567 = vcombine.low %v2558, %v2565
    %v2569 = vunpack.c.l.s4 1966171168
    %v2570 = vunpack.c.0.s8 %v2569
    %v2571 = vlaneseq
    %v2572 = vshrl.u32 %v2571, 7
    %v2573 = vsub.s32 %v2570, %v2572
    %v2574 = vrot.slane %v2566, %v2573
    %v2576 = vunpack.c.l.s4 1966171168
    %v2577 = vunpack.c.0.s8 %v2576
    %v2578 = vlaneseq
    %v2579 = vshrl.u32 %v2578, 7
    %v2580 = vsub.s32 %v2577, %v2579
    %v2581 = vrot.slane %v2567, %v2580
    %v2582 = vcombine.low %v2574, %v2581
    %v2583 = vcombine.low %v2006, %v2010
    %v2584 = vcombine.low %v2014, %v2018
    %v2585 = vcombine.low %v2022, %v2026
    %v2586 = vcombine.low %v2030, %v2034
    %v2588 = vunpack.c.l.s4 1966171168
    %v2589 = vunpack.c.0.s8 %v2588
    %v2590 = vlaneseq
    %v2591 = vshrl.u32 %v2590, 7
    %v2592 = vsub.s32 %v2589, %v2591
    %v2593 = vrot.slane %v2583, %v2592
    %v2595 = vunpack.c.l.s4 1966171168
    %v2596 = vunpack.c.0.s8 %v2595
    %v2597 = vlaneseq
    %v2598 = vshrl.u32 %v2597, 7
    %v2599 = vsub.s32 %v2596, %v2598
    %v2600 = vrot.slane %v2584, %v2599
    %v2602 = vunpack.c.l.s4 1966171168
    %v2603 = vunpack.c.0.s8 %v2602
    %v2604 = vlaneseq
    %v2605 = vshrl.u32 %v2604, 7
    %v2606 = vsub.s32 %v2603, %v2605
    %v2607 = vrot.slane %v2585, %v2606
    %v2609 = vunpack.c.l.s4 1966171168
    %v2610 = vunpack.c.0.s8 %v2609
    %v2611 = vlaneseq
    %v2612 = vshrl.u32 %v2611, 7
    %v2613 = vsub.s32 %v2610, %v2612
    %v2614 = vrot.slane %v2586, %v2613
    %v2615 = vcombine.low %v2593, %v2600
    %v2616 = vcombine.low %v2607, %v2614
    %v2618 = vunpack.c.l.s4 1966171168
    %v2619 = vunpack.c.0.s8 %v2618
    %v2620 = vlaneseq
    %v2621 = vshrl.u32 %v2620, 7
    %v2622 = vsub.s32 %v2619, %v2621
    %v2623 = vrot.slane %v2615, %v2622
    %v2625 = vunpack.c.l.s4 1966171168
    %v2626 = vunpack.c.0.s8 %v2625
    %v2627 = vlaneseq
    %v2628 = vshrl.u32 %v2627, 7
    %v2629 = vsub.s32 %v2626, %v2628
    %v2630 = vrot.slane %v2616, %v2629
    %v2631 = vcombine.low %v2623, %v2630
    %v2632 = vcombine.low %v2038, %v2042
    %v2633 = vcombine.low %v2046, %v2050
    %v2634 = vcombine.low %v2054, %v2058
    %v2635 = vcombine.low %v2062, %v2066
    %v2637 = vunpack.c.l.s4 1966171168
    %v2638 = vunpack.c.0.s8 %v2637
    %v2639 = vlaneseq
    %v2640 = vshrl.u32 %v2639, 7
    %v2641 = vsub.s32 %v2638, %v2640
    %v2642 = vrot.slane %v2632, %v2641
    %v2644 = vunpack.c.l.s4 1966171168
    %v2645 = vunpack.c.0.s8 %v2644
    %v2646 = vlaneseq
    %v2647 = vshrl.u32 %v2646, 7
    %v2648 = vsub.s32 %v2645, %v2647
    %v2649 = vrot.slane %v2633, %v2648
    %v2651 = vunpack.c.l.s4 1966171168
    %v2652 = vunpack.c.0.s8 %v2651
    %v2653 = vlaneseq
    %v2654 = vshrl.u32 %v2653, 7
    %v2655 = vsub.s32 %v2652, %v2654
    %v2656 = vrot.slane %v2634, %v2655
    %v2658 = vunpack.c.l.s4 1966171168
    %v2659 = vunpack.c.0.s8 %v2658
    %v2660 = vlaneseq
    %v2661 = vshrl.u32 %v2660, 7
    %v2662 = vsub.s32 %v2659, %v2661
    %v2663 = vrot.slane %v2635, %v2662
    %v2664 = vcombine.low %v2642, %v2649
    %v2665 = vcombine.low %v2656, %v2663
    %v2667 = vunpack.c.l.s4 1966171168
    %v2668 = vunpack.c.0.s8 %v2667
    %v2669 = vlaneseq
    %v2670 = vshrl.u32 %v2669, 7
    %v2671 = vsub.s32 %v2668, %v2670
    %v2672 = vrot.slane %v2664, %v2671
    %v2674 = vunpack.c.l.s4 1966171168
    %v2675 = vunpack.c.0.s8 %v2674
    %v2676 = vlaneseq
    %v2677 = vshrl.u32 %v2676, 7
    %v2678 = vsub.s32 %v2675, %v2677
    %v2679 = vrot.slane %v2665, %v2678
    %v2680 = vcombine.low %v2672, %v2679
    %v2681 = vcombine.low %v2070, %v2074
    %v2682 = vcombine.low %v2078, %v2082
    %v2683 = vcombine.low %v2086, %v2090
    %v2684 = vcombine.low %v2094, %v2098
    %v2686 = vunpack.c.l.s4 1966171168
    %v2687 = vunpack.c.0.s8 %v2686
    %v2688 = vlaneseq
    %v2689 = vshrl.u32 %v2688, 7
    %v2690 = vsub.s32 %v2687, %v2689
    %v2691 = vrot.slane %v2681, %v2690
    %v2693 = vunpack.c.l.s4 1966171168
    %v2694 = vunpack.c.0.s8 %v2693
    %v2695 = vlaneseq
    %v2696 = vshrl.u32 %v2695, 7
    %v2697 = vsub.s32 %v2694, %v2696
    %v2698 = vrot.slane %v2682, %v2697
    %v2700 = vunpack.c.l.s4 1966171168
    %v2701 = vunpack.c.0.s8 %v2700
    %v2702 = vlaneseq
    %v2703 = vshrl.u32 %v2702, 7
    %v2704 = vsub.s32 %v2701, %v2703
    %v2705 = vrot.slane %v2683, %v2704
    %v2707 = vunpack.c.l.s4 1966171168
    %v2708 = vunpack.c.0.s8 %v2707
    %v2709 = vlaneseq
    %v2710 = vshrl.u32 %v2709, 7
    %v2711 = vsub.s32 %v2708, %v2710
    %v2712 = vrot.slane %v2684, %v2711
    %v2713 = vcombine.low %v2691, %v2698
    %v2714 = vcombine.low %v2705, %v2712
    %v2716 = vunpack.c.l.s4 1966171168
    %v2717 = vunpack.c.0.s8 %v2716
    %v2718 = vlaneseq
    %v2719 = vshrl.u32 %v2718, 7
    %v2720 = vsub.s32 %v2717, %v2719
    %v2721 = vrot.slane %v2713, %v2720
    %v2723 = vunpack.c.l.s4 1966171168
    %v2724 = vunpack.c.0.s8 %v2723
    %v2725 = vlaneseq
    %v2726 = vshrl.u32 %v2725, 7
    %v2727 = vsub.s32 %v2724, %v2726
    %v2728 = vrot.slane %v2714, %v2727
    %v2729 = vcombine.low %v2721, %v2728
    %v2730 = vcombine.low %v2102, %v2106
    %v2731 = vcombine.low %v2110, %v2114
    %v2732 = vcombine.low %v2118, %v2122
    %v2733 = vcombine.low %v2126, %v2130
    %v2735 = vunpack.c.l.s4 1966171168
    %v2736 = vunpack.c.0.s8 %v2735
    %v2737 = vlaneseq
    %v2738 = vshrl.u32 %v2737, 7
    %v2739 = vsub.s32 %v2736, %v2738
    %v2740 = vrot.slane %v2730, %v2739
    %v2742 = vunpack.c.l.s4 1966171168
    %v2743 = vunpack.c.0.s8 %v2742
    %v2744 = vlaneseq
    %v2745 = vshrl.u32 %v2744, 7
    %v2746 = vsub.s32 %v2743, %v2745
    %v2747 = vrot.slane %v2731, %v2746
    %v2749 = vunpack.c.l.s4 1966171168
    %v2750 = vunpack.c.0.s8 %v2749
    %v2751 = vlaneseq
    %v2752 = vshrl.u32 %v2751, 7
    %v2753 = vsub.s32 %v2750, %v2752
    %v2754 = vrot.slane %v2732, %v2753
    %v2756 = vunpack.c.l.s4 1966171168
    %v2757 = vunpack.c.0.s8 %v2756
    %v2758 = vlaneseq
    %v2759 = vshrl.u32 %v2758, 7
    %v2760 = vsub.s32 %v2757, %v2759
    %v2761 = vrot.slane %v2733, %v2760
    %v2762 = vcombine.low %v2740, %v2747
    %v2763 = vcombine.low %v2754, %v2761
    %v2765 = vunpack.c.l.s4 1966171168
    %v2766 = vunpack.c.0.s8 %v2765
    %v2767 = vlaneseq
    %v2768 = vshrl.u32 %v2767, 7
    %v2769 = vsub.s32 %v2766, %v2768
    %v2770 = vrot.slane %v2762, %v2769
    %v2772 = vunpack.c.l.s4 1966171168
    %v2773 = vunpack.c.0.s8 %v2772
    %v2774 = vlaneseq
    %v2775 = vshrl.u32 %v2774, 7
    %v2776 = vsub.s32 %v2773, %v2775
    %v2777 = vrot.slane %v2763, %v2776
    %v2778 = vcombine.low %v2770, %v2777
    %v2779 = vcombine.low %v2134, %v2138
    %v2780 = vcombine.low %v2142, %v2146
    %v2781 = vcombine.low %v2150, %v2154
    %v2782 = vcombine.low %v2158, %v2162
    %v2784 = vunpack.c.l.s4 1966171168
    %v2785 = vunpack.c.0.s8 %v2784
    %v2786 = vlaneseq
    %v2787 = vshrl.u32 %v2786, 7
    %v2788 = vsub.s32 %v2785, %v2787
    %v2789 = vrot.slane %v2779, %v2788
    %v2791 = vunpack.c.l.s4 1966171168
    %v2792 = vunpack.c.0.s8 %v2791
    %v2793 = vlaneseq
    %v2794 = vshrl.u32 %v2793, 7
    %v2795 = vsub.s32 %v2792, %v2794
    %v2796 = vrot.slane %v2780, %v2795
    %v2798 = vunpack.c.l.s4 1966171168
    %v2799 = vunpack.c.0.s8 %v2798
    %v2800 = vlaneseq
    %v2801 = vshrl.u32 %v2800, 7
    %v2802 = vsub.s32 %v2799, %v2801
    %v2803 = vrot.slane %v2781, %v2802
    %v2805 = vunpack.c.l.s4 1966171168
    %v2806 = vunpack.c.0.s8 %v2805
    %v2807 = vlaneseq
    %v2808 = vshrl.u32 %v2807, 7
    %v2809 = vsub.s32 %v2806, %v2808
    %v2810 = vrot.slane %v2782, %v2809
    %v2811 = vcombine.low %v2789, %v2796
    %v2812 = vcombine.low %v2803, %v2810
    %v2814 = vunpack.c.l.s4 1966171168
    %v2815 = vunpack.c.0.s8 %v2814
    %v2816 = vlaneseq
    %v2817 = vshrl.u32 %v2816, 7
    %v2818 = vsub.s32 %v2815, %v2817
    %v2819 = vrot.slane %v2811, %v2818
    %v2821 = vunpack.c.l.s4 1966171168
    %v2822 = vunpack.c.0.s8 %v2821
    %v2823 = vlaneseq
    %v2824 = vshrl.u32 %v2823, 7
    %v2825 = vsub.s32 %v2822, %v2824
    %v2826 = vrot.slane %v2812, %v2825
    %v2827 = vcombine.low %v2819, %v2826
    %v2828 = vcombine.low %v2166, %v2170
    %v2829 = vcombine.low %v2174, %v2178
    %v2830 = vcombine.low %v2182, %v2186
    %v2831 = vcombine.low %v2190, %v2194
    %v2833 = vunpack.c.l.s4 1966171168
    %v2834 = vunpack.c.0.s8 %v2833
    %v2835 = vlaneseq
    %v2836 = vshrl.u32 %v2835, 7
    %v2837 = vsub.s32 %v2834, %v2836
    %v2838 = vrot.slane %v2828, %v2837
    %v2840 = vunpack.c.l.s4 1966171168
    %v2841 = vunpack.c.0.s8 %v2840
    %v2842 = vlaneseq
    %v2843 = vshrl.u32 %v2842, 7
    %v2844 = vsub.s32 %v2841, %v2843
    %v2845 = vrot.slane %v2829, %v2844
    %v2847 = vunpack.c.l.s4 1966171168
    %v2848 = vunpack.c.0.s8 %v2847
    %v2849 = vlaneseq
    %v2850 = vshrl.u32 %v2849, 7
    %v2851 = vsub.s32 %v2848, %v2850
    %v2852 = vrot.slane %v2830, %v2851
    %v2854 = vunpack.c.l.s4 1966171168
    %v2855 = vunpack.c.0.s8 %v2854
    %v2856 = vlaneseq
    %v2857 = vshrl.u32 %v2856, 7
    %v2858 = vsub.s32 %v2855, %v2857
    %v2859 = vrot.slane %v2831, %v2858
    %v2860 = vcombine.low %v2838, %v2845
    %v2861 = vcombine.low %v2852, %v2859
    %v2863 = vunpack.c.l.s4 1966171168
    %v2864 = vunpack.c.0.s8 %v2863
    %v2865 = vlaneseq
    %v2866 = vshrl.u32 %v2865, 7
    %v2867 = vsub.s32 %v2864, %v2866
    %v2868 = vrot.slane %v2860, %v2867
    %v2870 = vunpack.c.l.s4 1966171168
    %v2871 = vunpack.c.0.s8 %v2870
    %v2872 = vlaneseq
    %v2873 = vshrl.u32 %v2872, 7
    %v2874 = vsub.s32 %v2871, %v2873
    %v2875 = vrot.slane %v2861, %v2874
    %v2876 = vcombine.low %v2868, %v2875
    %v2877 = vcombine.low %v2198, %v2202
    %v2878 = vcombine.low %v2206, %v2210
    %v2879 = vcombine.low %v2214, %v2218
    %v2880 = vcombine.low %v2222, %v2226
    %v2882 = vunpack.c.l.s4 1966171168
    %v2883 = vunpack.c.0.s8 %v2882
    %v2884 = vlaneseq
    %v2885 = vshrl.u32 %v2884, 7
    %v2886 = vsub.s32 %v2883, %v2885
    %v2887 = vrot.slane %v2877, %v2886
    %v2889 = vunpack.c.l.s4 1966171168
    %v2890 = vunpack.c.0.s8 %v2889
    %v2891 = vlaneseq
    %v2892 = vshrl.u32 %v2891, 7
    %v2893 = vsub.s32 %v2890, %v2892
    %v2894 = vrot.slane %v2878, %v2893
    %v2896 = vunpack.c.l.s4 1966171168
    %v2897 = vunpack.c.0.s8 %v2896
    %v2898 = vlaneseq
    %v2899 = vshrl.u32 %v2898, 7
    %v2900 = vsub.s32 %v2897, %v2899
    %v2901 = vrot.slane %v2879, %v2900
    %v2903 = vunpack.c.l.s4 1966171168
    %v2904 = vunpack.c.0.s8 %v2903
    %v2905 = vlaneseq
    %v2906 = vshrl.u32 %v2905, 7
    %v2907 = vsub.s32 %v2904, %v2906
    %v2908 = vrot.slane %v2880, %v2907
    %v2909 = vcombine.low %v2887, %v2894
    %v2910 = vcombine.low %v2901, %v2908
    %v2912 = vunpack.c.l.s4 1966171168
    %v2913 = vunpack.c.0.s8 %v2912
    %v2914 = vlaneseq
    %v2915 = vshrl.u32 %v2914, 7
    %v2916 = vsub.s32 %v2913, %v2915
    %v2917 = vrot.slane %v2909, %v2916
    %v2919 = vunpack.c.l.s4 1966171168
    %v2920 = vunpack.c.0.s8 %v2919
    %v2921 = vlaneseq
    %v2922 = vshrl.u32 %v2921, 7
    %v2923 = vsub.s32 %v2920, %v2922
    %v2924 = vrot.slane %v2910, %v2923
    %v2925 = vcombine.low %v2917, %v2924
    %v2926 = vcombine.low %v2230, %v2234
    %v2927 = vcombine.low %v2238, %v2242
    %v2928 = vcombine.low %v2246, %v2250
    %v2929 = vcombine.low %v2254, %v2258
    %v2931 = vunpack.c.l.s4 1966171168
    %v2932 = vunpack.c.0.s8 %v2931
    %v2933 = vlaneseq
    %v2934 = vshrl.u32 %v2933, 7
    %v2935 = vsub.s32 %v2932, %v2934
    %v2936 = vrot.slane %v2926, %v2935
    %v2938 = vunpack.c.l.s4 1966171168
    %v2939 = vunpack.c.0.s8 %v2938
    %v2940 = vlaneseq
    %v2941 = vshrl.u32 %v2940, 7
    %v2942 = vsub.s32 %v2939, %v2941
    %v2943 = vrot.slane %v2927, %v2942
    %v2945 = vunpack.c.l.s4 1966171168
    %v2946 = vunpack.c.0.s8 %v2945
    %v2947 = vlaneseq
    %v2948 = vshrl.u32 %v2947, 7
    %v2949 = vsub.s32 %v2946, %v2948
    %v2950 = vrot.slane %v2928, %v2949
    %v2952 = vunpack.c.l.s4 1966171168
    %v2953 = vunpack.c.0.s8 %v2952
    %v2954 = vlaneseq
    %v2955 = vshrl.u32 %v2954, 7
    %v2956 = vsub.s32 %v2953, %v2955
    %v2957 = vrot.slane %v2929, %v2956
    %v2958 = vcombine.low %v2936, %v2943
    %v2959 = vcombine.low %v2950, %v2957
    %v2961 = vunpack.c.l.s4 1966171168
    %v2962 = vunpack.c.0.s8 %v2961
    %v2963 = vlaneseq
    %v2964 = vshrl.u32 %v2963, 7
    %v2965 = vsub.s32 %v2962, %v2964
    %v2966 = vrot.slane %v2958, %v2965
    %v2968 = vunpack.c.l.s4 1966171168
    %v2969 = vunpack.c.0.s8 %v2968
    %v2970 = vlaneseq
    %v2971 = vshrl.u32 %v2970, 7
    %v2972 = vsub.s32 %v2969, %v2971
    %v2973 = vrot.slane %v2959, %v2972
    %v2974 = vcombine.low %v2966, %v2973
    %v2975 = vcombine.low %v2262, %v2266
    %v2976 = vcombine.low %v2270, %v2274
    %v2977 = vcombine.low %v2278, %v2282
    %v2978 = vcombine.low %v2286, %v2290
    %v2980 = vunpack.c.l.s4 1966171168
    %v2981 = vunpack.c.0.s8 %v2980
    %v2982 = vlaneseq
    %v2983 = vshrl.u32 %v2982, 7
    %v2984 = vsub.s32 %v2981, %v2983
    %v2985 = vrot.slane %v2975, %v2984
    %v2987 = vunpack.c.l.s4 1966171168
    %v2988 = vunpack.c.0.s8 %v2987
    %v2989 = vlaneseq
    %v2990 = vshrl.u32 %v2989, 7
    %v2991 = vsub.s32 %v2988, %v2990
    %v2992 = vrot.slane %v2976, %v2991
    %v2994 = vunpack.c.l.s4 1966171168
    %v2995 = vunpack.c.0.s8 %v2994
    %v2996 = vlaneseq
    %v2997 = vshrl.u32 %v2996, 7
    %v2998 = vsub.s32 %v2995, %v2997
    %v2999 = vrot.slane %v2977, %v2998
    %v3001 = vunpack.c.l.s4 1966171168
    %v3002 = vunpack.c.0.s8 %v3001
    %v3003 = vlaneseq
    %v3004 = vshrl.u32 %v3003, 7
    %v3005 = vsub.s32 %v3002, %v3004
    %v3006 = vrot.slane %v2978, %v3005
    %v3007 = vcombine.low %v2985, %v2992
    %v3008 = vcombine.low %v2999, %v3006
    %v3010 = vunpack.c.l.s4 1966171168
    %v3011 = vunpack.c.0.s8 %v3010
    %v3012 = vlaneseq
    %v3013 = vshrl.u32 %v3012, 7
    %v3014 = vsub.s32 %v3011, %v3013
    %v3015 = vrot.slane %v3007, %v3014
    %v3017 = vunpack.c.l.s4 1966171168
    %v3018 = vunpack.c.0.s8 %v3017
    %v3019 = vlaneseq
    %v3020 = vshrl.u32 %v3019, 7
    %v3021 = vsub.s32 %v3018, %v3020
    %v3022 = vrot.slane %v3008, %v3021
    %v3023 = vcombine.low %v3015, %v3022
    %v3024 = vcombine.low %v2294, %v2298
    %v3025 = vcombine.low %v2302, %v2306
    %v3026 = vcombine.low %v2310, %v2314
    %v3027 = vcombine.low %v2318, %v2322
    %v3029 = vunpack.c.l.s4 1966171168
    %v3030 = vunpack.c.0.s8 %v3029
    %v3031 = vlaneseq
    %v3032 = vshrl.u32 %v3031, 7
    %v3033 = vsub.s32 %v3030, %v3032
    %v3034 = vrot.slane %v3024, %v3033
    %v3036 = vunpack.c.l.s4 1966171168
    %v3037 = vunpack.c.0.s8 %v3036
    %v3038 = vlaneseq
    %v3039 = vshrl.u32 %v3038, 7
    %v3040 = vsub.s32 %v3037, %v3039
    %v3041 = vrot.slane %v3025, %v3040
    %v3043 = vunpack.c.l.s4 1966171168
    %v3044 = vunpack.c.0.s8 %v3043
    %v3045 = vlaneseq
    %v3046 = vshrl.u32 %v3045, 7
    %v3047 = vsub.s32 %v3044, %v3046
    %v3048 = vrot.slane %v3026, %v3047
    %v3050 = vunpack.c.l.s4 1966171168
    %v3051 = vunpack.c.0.s8 %v3050
    %v3052 = vlaneseq
    %v3053 = vshrl.u32 %v3052, 7
    %v3054 = vsub.s32 %v3051, %v3053
    %v3055 = vrot.slane %v3027, %v3054
    %v3056 = vcombine.low %v3034, %v3041
    %v3057 = vcombine.low %v3048, %v3055
    %v3059 = vunpack.c.l.s4 1966171168
    %v3060 = vunpack.c.0.s8 %v3059
    %v3061 = vlaneseq
    %v3062 = vshrl.u32 %v3061, 7
    %v3063 = vsub.s32 %v3060, %v3062
    %v3064 = vrot.slane %v3056, %v3063
    %v3066 = vunpack.c.l.s4 1966171168
    %v3067 = vunpack.c.0.s8 %v3066
    %v3068 = vlaneseq
    %v3069 = vshrl.u32 %v3068, 7
    %v3070 = vsub.s32 %v3067, %v3069
    %v3071 = vrot.slane %v3057, %v3070
    %v3072 = vcombine.low %v3064, %v3071
    %v3073 = vcombine.low %v2326, %v2330
    %v3074 = vcombine.low %v2334, %v2338
    %v3075 = vcombine.low %v2342, %v2346
    %v3076 = vcombine.low %v2350, %v2354
    %v3078 = vunpack.c.l.s4 1966171168
    %v3079 = vunpack.c.0.s8 %v3078
    %v3080 = vlaneseq
    %v3081 = vshrl.u32 %v3080, 7
    %v3082 = vsub.s32 %v3079, %v3081
    %v3083 = vrot.slane %v3073, %v3082
    %v3085 = vunpack.c.l.s4 1966171168
    %v3086 = vunpack.c.0.s8 %v3085
    %v3087 = vlaneseq
    %v3088 = vshrl.u32 %v3087, 7
    %v3089 = vsub.s32 %v3086, %v3088
    %v3090 = vrot.slane %v3074, %v3089
    %v3092 = vunpack.c.l.s4 1966171168
    %v3093 = vunpack.c.0.s8 %v3092
    %v3094 = vlaneseq
    %v3095 = vshrl.u32 %v3094, 7
    %v3096 = vsub.s32 %v3093, %v3095
    %v3097 = vrot.slane %v3075, %v3096
    %v3099 = vunpack.c.l.s4 1966171168
    %v3100 = vunpack.c.0.s8 %v3099
    %v3101 = vlaneseq
    %v3102 = vshrl.u32 %v3101, 7
    %v3103 = vsub.s32 %v3100, %v3102
    %v3104 = vrot.slane %v3076, %v3103
    %v3105 = vcombine.low %v3083, %v3090
    %v3106 = vcombine.low %v3097, %v3104
    %v3108 = vunpack.c.l.s4 1966171168
    %v3109 = vunpack.c.0.s8 %v3108
    %v3110 = vlaneseq
    %v3111 = vshrl.u32 %v3110, 7
    %v3112 = vsub.s32 %v3109, %v3111
    %v3113 = vrot.slane %v3105, %v3112
    %v3115 = vunpack.c.l.s4 1966171168
    %v3116 = vunpack.c.0.s8 %v3115
    %v3117 = vlaneseq
    %v3118 = vshrl.u32 %v3117, 7
    %v3119 = vsub.s32 %v3116, %v3118
    %v3120 = vrot.slane %v3106, %v3119
    %v3121 = vcombine.low %v3113, %v3120
    %v3122 = vcombine.low %v2358, %v2362
    %v3123 = vcombine.low %v2366, %v2370
    %v3124 = vcombine.low %v2374, %v2378
    %v3125 = vcombine.low %v2382, %v2386
    %v3127 = vunpack.c.l.s4 1966171168
    %v3128 = vunpack.c.0.s8 %v3127
    %v3129 = vlaneseq
    %v3130 = vshrl.u32 %v3129, 7
    %v3131 = vsub.s32 %v3128, %v3130
    %v3132 = vrot.slane %v3122, %v3131
    %v3134 = vunpack.c.l.s4 1966171168
    %v3135 = vunpack.c.0.s8 %v3134
    %v3136 = vlaneseq
    %v3137 = vshrl.u32 %v3136, 7
    %v3138 = vsub.s32 %v3135, %v3137
    %v3139 = vrot.slane %v3123, %v3138
    %v3141 = vunpack.c.l.s4 1966171168
    %v3142 = vunpack.c.0.s8 %v3141
    %v3143 = vlaneseq
    %v3144 = vshrl.u32 %v3143, 7
    %v3145 = vsub.s32 %v3142, %v3144
    %v3146 = vrot.slane %v3124, %v3145
    %v3148 = vunpack.c.l.s4 1966171168
    %v3149 = vunpack.c.0.s8 %v3148
    %v3150 = vlaneseq
    %v3151 = vshrl.u32 %v3150, 7
    %v3152 = vsub.s32 %v3149, %v3151
    %v3153 = vrot.slane %v3125, %v3152
    %v3154 = vcombine.low %v3132, %v3139
    %v3155 = vcombine.low %v3146, %v3153
    %v3157 = vunpack.c.l.s4 1966171168
    %v3158 = vunpack.c.0.s8 %v3157
    %v3159 = vlaneseq
    %v3160 = vshrl.u32 %v3159, 7
    %v3161 = vsub.s32 %v3158, %v3160
    %v3162 = vrot.slane %v3154, %v3161
    %v3164 = vunpack.c.l.s4 1966171168
    %v3165 = vunpack.c.0.s8 %v3164
    %v3166 = vlaneseq
    %v3167 = vshrl.u32 %v3166, 7
    %v3168 = vsub.s32 %v3165, %v3167
    %v3169 = vrot.slane %v3155, %v3168
    %v3170 = vcombine.low %v3162, %v3169
    %3171 = vset.pattern.permute.xlu0 0
    %3172 = vperm.xlu0 %3171, %v2435
    %v3173 = vpop.permute.xlu0 %3172
    %3174 = vset.pattern.permute.xlu0 0
    %3175 = vperm.xlu0 %3174, %v2484
    %v3176 = vpop.permute.xlu0 %3175
    %3177 = vset.pattern.permute.xlu0 0
    %3178 = vperm.xlu0 %3177, %v2533
    %v3179 = vpop.permute.xlu0 %3178
    %3180 = vset.pattern.permute.xlu0 0
    %3181 = vperm.xlu0 %3180, %v2582
    %v3182 = vpop.permute.xlu0 %3181
    %3183 = vset.pattern.permute.xlu0 0
    %3184 = vperm.xlu0 %3183, %v2631
    %v3185 = vpop.permute.xlu0 %3184
    %3186 = vset.pattern.permute.xlu0 0
    %3187 = vperm.xlu0 %3186, %v2680
    %v3188 = vpop.permute.xlu0 %3187
    %3189 = vset.pattern.permute.xlu0 0
    %3190 = vperm.xlu0 %3189, %v2729
    %v3191 = vpop.permute.xlu0 %3190
    %3192 = vset.pattern.permute.xlu0 0
    %3193 = vperm.xlu0 %3192, %v2778
    %v3194 = vpop.permute.xlu0 %3193
    %3195 = vset.pattern.permute.xlu0 0
    %3196 = vperm.xlu0 %3195, %v2827
    %v3197 = vpop.permute.xlu0 %3196
    %3198 = vset.pattern.permute.xlu0 0
    %3199 = vperm.xlu0 %3198, %v2876
    %v3200 = vpop.permute.xlu0 %3199
    %3201 = vset.pattern.permute.xlu0 0
    %3202 = vperm.xlu0 %3201, %v2925
    %v3203 = vpop.permute.xlu0 %3202
    %3204 = vset.pattern.permute.xlu0 0
    %3205 = vperm.xlu0 %3204, %v2974
    %v3206 = vpop.permute.xlu0 %3205
    %3207 = vset.pattern.permute.xlu0 0
    %3208 = vperm.xlu0 %3207, %v3023
    %v3209 = vpop.permute.xlu0 %3208
    %3210 = vset.pattern.permute.xlu0 0
    %3211 = vperm.xlu0 %3210, %v3072
    %v3212 = vpop.permute.xlu0 %3211
    %3213 = vset.pattern.permute.xlu0 0
    %3214 = vperm.xlu0 %3213, %v3121
    %v3215 = vpop.permute.xlu0 %3214
    %3216 = vset.pattern.permute.xlu0 0
    %3217 = vperm.xlu0 %3216, %v3170
    %v3218 = vpop.permute.xlu0 %3217
    %v3219 = vlaneseq
    %v3220 = vshrl.u32 %v3219, 7
    %v3221 = vsub.s32 %v1732, %v3220
    %v3222 = vrot.slane %v3173, %v3221
    %v3223 = vlaneseq
    %v3224 = vshrl.u32 %v3223, 7
    %v3225 = vsub.s32 %v1737, %v3224
    %v3226 = vrot.slane %v3176, %v3225
    %v3227 = vsel %vm1742, %v3226, %v3222
    %v3228 = vlaneseq
    %v3229 = vshrl.u32 %v3228, 7
    %v3230 = vsub.s32 %v1744, %v3229
    %v3231 = vrot.slane %v3179, %v3230
    %v3232 = vsel %vm1749, %v3231, %v3227
    %v3233 = vlaneseq
    %v3234 = vshrl.u32 %v3233, 7
    %v3235 = vsub.s32 %v1751, %v3234
    %v3236 = vrot.slane %v3182, %v3235
    %v3237 = vsel %vm1756, %v3236, %v3232
    %v3238 = vlaneseq
    %v3239 = vshrl.u32 %v3238, 7
    %v3240 = vsub.s32 %v1758, %v3239
    %v3241 = vrot.slane %v3185, %v3240
    %v3242 = vsel %vm1763, %v3241, %v3237
    %v3243 = vlaneseq
    %v3244 = vshrl.u32 %v3243, 7
    %v3245 = vsub.s32 %v1765, %v3244
    %v3246 = vrot.slane %v3188, %v3245
    %v3247 = vsel %vm1770, %v3246, %v3242
    %v3248 = vlaneseq
    %v3249 = vshrl.u32 %v3248, 7
    %v3250 = vsub.s32 %v1772, %v3249
    %v3251 = vrot.slane %v3191, %v3250
    %v3252 = vsel %vm1777, %v3251, %v3247
    %v3253 = vlaneseq
    %v3254 = vshrl.u32 %v3253, 7
    %v3255 = vsub.s32 %v1779, %v3254
    %v3256 = vrot.slane %v3194, %v3255
    %v3257 = vsel %vm1784, %v3256, %v3252
    %v3258 = vlaneseq
    %v3259 = vshrl.u32 %v3258, 7
    %v3260 = vsub.s32 %v1786, %v3259
    %v3261 = vrot.slane %v3197, %v3260
    %v3262 = vsel %vm1791, %v3261, %v3257
    %v3263 = vlaneseq
    %v3264 = vshrl.u32 %v3263, 7
    %v3265 = vsub.s32 %v1793, %v3264
    %v3266 = vrot.slane %v3200, %v3265
    %v3267 = vsel %vm1798, %v3266, %v3262
    %v3268 = vlaneseq
    %v3269 = vshrl.u32 %v3268, 7
    %v3270 = vsub.s32 %v1800, %v3269
    %v3271 = vrot.slane %v3203, %v3270
    %v3272 = vsel %vm1805, %v3271, %v3267
    %v3273 = vlaneseq
    %v3274 = vshrl.u32 %v3273, 7
    %v3275 = vsub.s32 %v1807, %v3274
    %v3276 = vrot.slane %v3206, %v3275
    %v3277 = vsel %vm1812, %v3276, %v3272
    %v3278 = vlaneseq
    %v3279 = vshrl.u32 %v3278, 7
    %v3280 = vsub.s32 %v1814, %v3279
    %v3281 = vrot.slane %v3209, %v3280
    %v3282 = vsel %vm1819, %v3281, %v3277
    %v3283 = vlaneseq
    %v3284 = vshrl.u32 %v3283, 7
    %v3285 = vsub.s32 %v1821, %v3284
    %v3286 = vrot.slane %v3212, %v3285
    %v3287 = vsel %vm1826, %v3286, %v3282
    %v3288 = vlaneseq
    %v3289 = vshrl.u32 %v3288, 7
    %v3290 = vsub.s32 %v1828, %v3289
    %v3291 = vrot.slane %v3215, %v3290
    %v3292 = vsel %vm1833, %v3291, %v3287
    %v3293 = vlaneseq
    %v3294 = vshrl.u32 %v3293, 7
    %v3295 = vsub.s32 %v1835, %v3294
    %v3296 = vrot.slane %v3218, %v3295
    %v3297 = vsel %vm1840, %v3296, %v3292
    %v3299 = vunpack.c.l.s4 1966171168
    %v3300 = vunpack.c.0.s8 %v3299
    %v3301 = vlaneseq
    %v3302 = vshrl.u32 %v3301, 7
    %v3303 = vsub.s32 %v3300, %v3302
    %v3304 = vrot.slane %v3297, %v3303
    %v3306 = vunpack.c.l.s4 1966171168
    %v3307 = vunpack.c.0.s8 %v3306
    %v3308 = vlaneseq
    %v3309 = vshrl.u32 %v3308, 7
    %v3310 = vsub.s32 %v3307, %v3309
    %v3311 = vrot.slane %v3304, %v3310
    %v3313 = vmul.f32 %v1858, %v3311
    %v3314 = vadd.f32 %v1857, %v3313
    %v3315 = vsub.f32 0.0, %v3314
    %s3316 = sadd.s32 0, 0
    %s3317 = smul.u32 %s3316, 128
    %v3318 = vlaneseq
    %v3319 = vshrl.u32 %v3318, 7
    %v3320 = vmul.u32 %v3319, 128
    %v3321 = vadd.s32 %v3320, %v1732
    %v3322 = vstv %s3317
    %v3323 = vadd.s32 %v3322, %v3321
    %vm3324 = vcmp.lt.s32.totalorder %v3323, 8
    %v3325 = vsel %vm3324, %v3315, 0.0
    %v3326 = vld [vmem:[#allocation6] sm:$0x1]
    %v3327 = vadd.f32 %v3326, %v3325
    %3328 = vst [vmem:[#allocation6] sm:$0x1] %v3327
    // Predicated region
    $region26: #{tpu_custom_call.1} parent=1 // pred_check
      _
    $region27: #{tpu_custom_call.1} parent=1 // pred_check_branch
      %3330 = sbr.rel (0) target = $region29
    $region28: #{tpu_custom_call.1} parent=1 // pred_region
      %s3332 = ssub.s32 16, 16
      %3333 = vsyncadd [#allocation5], %s3332
      %s3335 = sshll.u32 [#allocation6], 4
      %s3336 = int_to_ptr.vmem [resolvable:$true] %s3335
      %3338 = dma.vmem_to_hbm [thread:$0]  %s3336, 16, %s4, [#allocation5]
    $region29: #{tpu_custom_call.1} parent=1 // pred_fallthru
      _
    // Predicated region
    $region30: #{tpu_custom_call.1} parent=1 // pred_check
      _
    $region31: #{tpu_custom_call.1} parent=1 // pred_check_branch
      %3340 = sbr.rel (0) target = $region33
    $region32: #{tpu_custom_call.1} parent=1 // pred_region
      %3341 = dma.done [#allocation5], 16
    $region33: #{tpu_custom_call.1} parent=1 // pred_fallthru
      _
    %3342 = vsyncpa [#allocation4], 1
    %3343 = vsyncpa [#allocation5], 1

</llo_original>
